<compile_context>
chip_gen: v5e
topology: v5e:2x2
jax: 0.10.0
libtpu: 0.0.40
codegen_flags: <defaults>
</compile_context>

<pallas_src>
import jax
import jax.numpy as jnp
from jax.experimental import pallas as pl
from jax.experimental.pallas import tpu as pltpu


def _sigmoid_eup(v):
    # EUP-routed sigmoid (tanh), no VALU divide.
    return 0.5 * jnp.tanh(0.5 * v) + 0.5


# ----------------------------------------------------------------------------
# Fused kernel: per grid step, project TC timesteps of x and run TC GRU steps.
# ----------------------------------------------------------------------------

def _gru_seq_kernel(x_ref, wih_ref, whh_ref, bx_ref, bhn_ref, h0_ref,
                    out_ref, h_scr):
    B, TC, D = x_ref.shape
    H = h0_ref.shape[1]

    @pl.when(pl.program_id(0) == 0)
    def _():
        h_scr[...] = h0_ref[...]

    # Fused input projection for the whole TC-step chunk: one bf16 MXU matmul
    # per gate (f32 accumulation). Gate-major layout keeps H lane-dense.
    x2d = x_ref[...].reshape(B * TC, D).astype(jnp.bfloat16)

    def proj(g):
        y = jnp.dot(x2d, wih_ref[g], preferred_element_type=jnp.float32)
        return y.reshape(B, TC, H) + bx_ref[g]          # bias fold (b_i* [+ b_h*])

    gx_r, gx_z, gx_n = proj(0), proj(1), proj(2)

    bhn = bhn_ref[...]                                   # (1, H) f32
    h = h_scr[...]                                       # (B, H) f32 carry (VMEM)

    # Fully-unrolled inner loop over the TC timesteps of this chunk
    # (static trip count; h is the loop-carried state).
    for t in range(TC):
        hb = h.astype(jnp.bfloat16)
        hr = jnp.dot(hb, whh_ref[0], preferred_element_type=jnp.float32)
        hz = jnp.dot(hb, whh_ref[1], preferred_element_type=jnp.float32)
        hn = jnp.dot(hb, whh_ref[2], preferred_element_type=jnp.float32)
        r = _sigmoid_eup(gx_r[:, t, :] + hr)
        z = _sigmoid_eup(gx_z[:, t, :] + hz)
        n = jnp.tanh(gx_n[:, t, :] + r * (hn + bhn))     # b_hn stays inside r*(...)
        h = n + z * (h - n)                              # == (1-z)*n + z*h
        out_ref[:, t:t + 1, :] = h.astype(out_ref.dtype).reshape(B, 1, H)

    h_scr[...] = h


def _gru_pallas(x, params, h0, *, tc):
    B, T, D = x.shape
    H = h0.shape[1]
    return pl.pallas_call(
        _gru_seq_kernel,
        out_shape=jax.ShapeDtypeStruct((B, T, H), jnp.float32),
        grid=(T // tc,),
        in_specs=[
            pl.BlockSpec((B, tc, D), lambda c: (0, c, 0)),   # streamed x chunk
            pl.BlockSpec((3, D, H), lambda c: (0, 0, 0)),    # resident W_ih^T (gate-major, bf16)
            pl.BlockSpec((3, H, H), lambda c: (0, 0, 0)),    # resident W_hh^T (gate-major, bf16)
            pl.BlockSpec((3, 1, H), lambda c: (0, 0, 0)),    # resident fused input-side biases
            pl.BlockSpec((1, H), lambda c: (0, 0)),          # resident b_hn
            pl.BlockSpec((B, H), lambda c: (0, 0)),          # resident h0
        ],
        out_specs=pl.BlockSpec((B, tc, H), lambda c: (0, c, 0)),
        scratch_shapes=[pltpu.VMEM((B, H), jnp.float32)],    # hidden-state carry
        compiler_params=pltpu.CompilerParams(
            dimension_semantics=("arbitrary",),              # sequential recurrence
            vmem_limit_bytes=48 * 1024 * 1024),              # safe on v5e/v6e/v7x
    )(x, params["wih_g"], params["whh_g"], params["bx"], params["bhn"], h0)


# ----------------------------------------------------------------------------
# Module forward + parameter packing (matmul-ready layouts folded once)
# ----------------------------------------------------------------------------

def stateful_gru_apply(params, x, h_t=None, *, tc=8):
    """StatefulGRU.forward: x (B, T, D) -> (outputs (B, T, H), h_T (B, H))."""
    B, T, D = x.shape
    H = params["bhn"].shape[-1]
    if h_t is None:
        h_t = jnp.zeros((B, H), jnp.float32)
    tc = max(8, (tc // 8) * 8)                    # (tc, ·) block sublane constraint
    Tp = pl.cdiv(T, tc) * tc
    xp = x if Tp == T else jnp.pad(x, ((0, 0), (0, Tp - T), (0, 0)))
    out = _gru_pallas(xp, params, h_t.astype(jnp.float32), tc=tc)   # (B, Tp, H)
    outputs = out if Tp == T else out[:, :T, :]
    return outputs, outputs[:, T - 1, :]


def init_raw_gru(input_dim, hidden_dim, *, seed=0):
    """Mirrors nn.GRUCell init: U(-1/sqrt(H), 1/sqrt(H)), PyTorch layouts."""
    k1, k2, k3, k4 = jax.random.split(jax.random.PRNGKey(seed), 4)
    bound = 1.0 / (hidden_dim ** 0.5)
    return {
        "wih": jax.random.uniform(k1, (3 * hidden_dim, input_dim), jnp.float32, -bound, bound),
        "whh": jax.random.uniform(k2, (3 * hidden_dim, hidden_dim), jnp.float32, -bound, bound),
        "bih": jax.random.uniform(k3, (3 * hidden_dim,), jnp.float32, -bound, bound),
        "bhh": jax.random.uniform(k4, (3 * hidden_dim,), jnp.float32, -bound, bound),
    }


def pack_params(raw):
    """Fold kernel-ready layouts once: gate-major bf16 W^T, fused biases."""
    wih, whh, bih, bhh = raw["wih"], raw["whh"], raw["bih"], raw["bhh"]
    H = bih.shape[0] // 3
    D = wih.shape[1]
    wih_g = wih.reshape(3, H, D).transpose(0, 2, 1).astype(jnp.bfloat16)   # (3, D, H)
    whh_g = whh.reshape(3, H, H).transpose(0, 2, 1).astype(jnp.bfloat16)   # (3, H, H)
    bih3 = bih.reshape(3, H)
    bhh3 = bhh.reshape(3, H)
    # b_hr/b_hz fold into the input-side r/z biases; b_hn must stay separate.
    bx = jnp.stack([bih3[0] + bhh3[0], bih3[1] + bhh3[1], bih3[2]], axis=0)
    return {
        "wih_g": wih_g,
        "whh_g": whh_g,
        "bx": bx.reshape(3, 1, H).astype(jnp.float32),
        "bhn": bhh3[2].reshape(1, H).astype(jnp.float32),
    }


# ----------------------------------------------------------------------------
# Pure-JAX reference (mirrors the PyTorch per-timestep loop, f32 weights)
# ----------------------------------------------------------------------------

def gru_reference(raw, x, h_t=None):
    B, T, D = x.shape
    H = raw["bih"].shape[0] // 3
    if h_t is None:
        h_t = jnp.zeros((B, H), jnp.float32)
    wih_t, whh_t = raw["wih"].T, raw["whh"].T
    bih, bhh = raw["bih"], raw["bhh"]
    outs = []
    for t in range(T):
        gx = x[:, t, :] @ wih_t + bih
        gh = h_t @ whh_t + bhh
        r = jax.nn.sigmoid(gx[:, :H] + gh[:, :H])
        z = jax.nn.sigmoid(gx[:, H:2 * H] + gh[:, H:2 * H])
        n = jnp.tanh(gx[:, 2 * H:] + r * gh[:, 2 * H:])
        h_t = (1.0 - z) * n + z * h_t
        outs.append(h_t[:, None, :])
    return jnp.concatenate(outs, axis=1), h_t


# ----------------------------------------------------------------------------

if __name__ == "__main__":
    B, T, D, H = 2, 8, 16, 32

    raw = init_raw_gru(D, H, seed=0)
    params = pack_params(raw)
    x = jax.random.normal(jax.random.PRNGKey(0), (B, T, D), jnp.float32)

    fwd = jax.jit(lambda inp: stateful_gru_apply(params, inp))
    out, h_last = jax.block_until_ready(fwd(x))

    ref_out, ref_h = gru_reference(raw, x)
    assert out.shape == (B, T, H) and h_last.shape == (B, H), (out.shape, h_last.shape)
    assert bool(jnp.all(jnp.isfinite(out)))
    # bf16 MXU operands (f32 accumulation) vs f32 reference -> loose-ish tolerance
    assert bool(jnp.allclose(out, ref_out, atol=2e-2, rtol=2e-2)), \
        float(jnp.max(jnp.abs(out - ref_out)))
    assert bool(jnp.allclose(h_last, ref_h, atol=2e-2, rtol=2e-2)), \
        float(jnp.max(jnp.abs(h_last - ref_h)))
    print("KERNEL_OK")
</pallas_src>

<mosaic_0001>
module attributes {stable_mosaic.version = 11 : i64} {
  func.func @_gru_seq_kernel(%arg0: i32, %arg1: memref<2x8x16xf32, #tpu.memory_space<vmem>>, %arg2: memref<3x16x32xbf16, #tpu.memory_space<vmem>>, %arg3: memref<3x32x32xbf16, #tpu.memory_space<vmem>>, %arg4: memref<3x1x32xf32, #tpu.memory_space<vmem>>, %arg5: memref<1x32xf32, #tpu.memory_space<vmem>>, %arg6: memref<2x32xf32, #tpu.memory_space<vmem>>, %arg7: memref<2x8x32xf32, #tpu.memory_space<vmem>>, %arg8: memref<2x32xf32, #tpu.memory_space<vmem>>) attributes {dimension_semantics = [#tpu.dimension_semantics<arbitrary>], iteration_bounds = array<i64: 1>, scalar_prefetch = 0 : i64, scratch_operands = 1 : i64, tpu.core_type = #tpu.core_type<tc>, window_params = [{transform_indices = @transform_0, window_bounds = array<i64: 2, 8, 16>}, {pipeline_mode = #tpu.pipeline_mode<synchronous>, transform_indices = @transform_1, window_bounds = array<i64: 3, 16, 32>}, {pipeline_mode = #tpu.pipeline_mode<synchronous>, transform_indices = @transform_2, window_bounds = array<i64: 3, 32, 32>}, {pipeline_mode = #tpu.pipeline_mode<synchronous>, transform_indices = @transform_3, window_bounds = array<i64: 3, 1, 32>}, {pipeline_mode = #tpu.pipeline_mode<synchronous>, transform_indices = @transform_4, window_bounds = array<i64: 1, 32>}, {pipeline_mode = #tpu.pipeline_mode<synchronous>, transform_indices = @transform_5, window_bounds = array<i64: 2, 32>}, {transform_indices = @transform_6, window_bounds = array<i64: 2, 8, 32>}]} {
    %c0_i32 = arith.constant 0 : i32
    %0 = arith.cmpi eq, %arg0, %c0_i32 : i32
    %1 = arith.extui %0 : i1 to i32
    %c0_i32_0 = arith.constant 0 : i32
    %2 = arith.cmpi ne, %1, %c0_i32_0 : i32
    scf.if %2 {
      %c0_190 = arith.constant 0 : index
      %c0_191 = arith.constant 0 : index
      %372 = vector.load %arg6[%c0_190, %c0_191] : memref<2x32xf32, #tpu.memory_space<vmem>>, vector<2x32xf32>
      %c0_192 = arith.constant 0 : index
      %c0_193 = arith.constant 0 : index
      %373 = vector.load %arg8[%c0_192, %c0_193] : memref<2x32xf32, #tpu.memory_space<vmem>>, vector<2x32xf32>
      tpu.vector_store %arg8[%c0_192, %c0_193], %372 {strides = array<i32>} : memref<2x32xf32, #tpu.memory_space<vmem>>, vector<2x32xf32>,
    } else {
    }
    %c0 = arith.constant 0 : index
    %c0_1 = arith.constant 0 : index
    %c0_2 = arith.constant 0 : index
    %3 = vector.load %arg1[%c0, %c0_1, %c0_2] : memref<2x8x16xf32, #tpu.memory_space<vmem>>, vector<2x8x16xf32>
    %4 = vector.shape_cast %3 : vector<2x8x16xf32> to vector<16x16xf32>
    %5 = arith.truncf %4 : vector<16x16xf32> to vector<16x16xbf16>
    %c0_3 = arith.constant 0 : index
    %c0_4 = arith.constant 0 : index
    %c0_5 = arith.constant 0 : index
    %6 = vector.load %arg2[%c0_3, %c0_4, %c0_5] : memref<3x16x32xbf16, #tpu.memory_space<vmem>>, vector<1x16x32xbf16>
    %7 = vector.shape_cast %6 : vector<1x16x32xbf16> to vector<16x32xbf16>
    %cst = arith.constant dense<0.000000e+00> : vector<16x32xf32>
    %8 = tpu.matmul %5, %7, %cst {dimension_numbers = #tpu.dot_dimension_numbers<[1], [0], [0], [1], [0, 0, 1, 1], [], []>} : vector<16x16xbf16>, vector<16x32xbf16>, vector<16x32xf32> -> vector<16x32xf32>
    %9 = vector.shape_cast %8 : vector<16x32xf32> to vector<2x8x32xf32>
    %c0_6 = arith.constant 0 : index
    %c0_7 = arith.constant 0 : index
    %c0_8 = arith.constant 0 : index
    %10 = vector.load %arg4[%c0_6, %c0_7, %c0_8] : memref<3x1x32xf32, #tpu.memory_space<vmem>>, vector<1x1x32xf32>
    %11 = vector.shape_cast %10 : vector<1x1x32xf32> to vector<1x32xf32>
    %12 = vector.shape_cast %11 : vector<1x32xf32> to vector<1x1x32xf32>
    %13 = vector.broadcast %12 : vector<1x1x32xf32> to vector<2x8x32xf32>
    %14 = arith.addf %9, %13 : vector<2x8x32xf32>
    %c1 = arith.constant 1 : index
    %c0_9 = arith.constant 0 : index
    %c0_10 = arith.constant 0 : index
    %15 = vector.load %arg2[%c1, %c0_9, %c0_10] : memref<3x16x32xbf16, #tpu.memory_space<vmem>>, vector<1x16x32xbf16>
    %16 = vector.shape_cast %15 : vector<1x16x32xbf16> to vector<16x32xbf16>
    %cst_11 = arith.constant dense<0.000000e+00> : vector<16x32xf32>
    %17 = tpu.matmul %5, %16, %cst_11 {dimension_numbers = #tpu.dot_dimension_numbers<[1], [0], [0], [1], [0, 0, 1, 1], [], []>} : vector<16x16xbf16>, vector<16x32xbf16>, vector<16x32xf32> -> vector<16x32xf32>
    %18 = vector.shape_cast %17 : vector<16x32xf32> to vector<2x8x32xf32>
    %c1_12 = arith.constant 1 : index
    %c0_13 = arith.constant 0 : index
    %c0_14 = arith.constant 0 : index
    %19 = vector.load %arg4[%c1_12, %c0_13, %c0_14] : memref<3x1x32xf32, #tpu.memory_space<vmem>>, vector<1x1x32xf32>
    %20 = vector.shape_cast %19 : vector<1x1x32xf32> to vector<1x32xf32>
    %21 = vector.shape_cast %20 : vector<1x32xf32> to vector<1x1x32xf32>
    %22 = vector.broadcast %21 : vector<1x1x32xf32> to vector<2x8x32xf32>
    %23 = arith.addf %18, %22 : vector<2x8x32xf32>
    %c2 = arith.constant 2 : index
    %c0_15 = arith.constant 0 : index
    %c0_16 = arith.constant 0 : index
    %24 = vector.load %arg2[%c2, %c0_15, %c0_16] : memref<3x16x32xbf16, #tpu.memory_space<vmem>>, vector<1x16x32xbf16>
    %25 = vector.shape_cast %24 : vector<1x16x32xbf16> to vector<16x32xbf16>
    %cst_17 = arith.constant dense<0.000000e+00> : vector<16x32xf32>
    %26 = tpu.matmul %5, %25, %cst_17 {dimension_numbers = #tpu.dot_dimension_numbers<[1], [0], [0], [1], [0, 0, 1, 1], [], []>} : vector<16x16xbf16>, vector<16x32xbf16>, vector<16x32xf32> -> vector<16x32xf32>
    %27 = vector.shape_cast %26 : vector<16x32xf32> to vector<2x8x32xf32>
    %c2_18 = arith.constant 2 : index
    %c0_19 = arith.constant 0 : index
    %c0_20 = arith.constant 0 : index
    %28 = vector.load %arg4[%c2_18, %c0_19, %c0_20] : memref<3x1x32xf32, #tpu.memory_space<vmem>>, vector<1x1x32xf32>
    %29 = vector.shape_cast %28 : vector<1x1x32xf32> to vector<1x32xf32>
    %30 = vector.shape_cast %29 : vector<1x32xf32> to vector<1x1x32xf32>
    %31 = vector.broadcast %30 : vector<1x1x32xf32> to vector<2x8x32xf32>
    %32 = arith.addf %27, %31 : vector<2x8x32xf32>
    %c0_21 = arith.constant 0 : index
    %c0_22 = arith.constant 0 : index
    %33 = vector.load %arg5[%c0_21, %c0_22] : memref<1x32xf32, #tpu.memory_space<vmem>>, vector<1x32xf32>
    %c0_23 = arith.constant 0 : index
    %c0_24 = arith.constant 0 : index
    %34 = vector.load %arg8[%c0_23, %c0_24] : memref<2x32xf32, #tpu.memory_space<vmem>>, vector<2x32xf32>
    %35 = arith.truncf %34 : vector<2x32xf32> to vector<2x32xbf16>
    %c0_25 = arith.constant 0 : index
    %c0_26 = arith.constant 0 : index
    %c0_27 = arith.constant 0 : index
    %36 = vector.load %arg3[%c0_25, %c0_26, %c0_27] : memref<3x32x32xbf16, #tpu.memory_space<vmem>>, vector<1x32x32xbf16>
    %37 = vector.shape_cast %36 : vector<1x32x32xbf16> to vector<32x32xbf16>
    %cst_28 = arith.constant dense<0.000000e+00> : vector<2x32xf32>
    %38 = tpu.matmul %35, %37, %cst_28 {dimension_numbers = #tpu.dot_dimension_numbers<[1], [0], [0], [1], [0, 0, 1, 1], [], []>} : vector<2x32xbf16>, vector<32x32xbf16>, vector<2x32xf32> -> vector<2x32xf32>
    %c1_29 = arith.constant 1 : index
    %c0_30 = arith.constant 0 : index
    %c0_31 = arith.constant 0 : index
    %39 = vector.load %arg3[%c1_29, %c0_30, %c0_31] : memref<3x32x32xbf16, #tpu.memory_space<vmem>>, vector<1x32x32xbf16>
    %40 = vector.shape_cast %39 : vector<1x32x32xbf16> to vector<32x32xbf16>
    %cst_32 = arith.constant dense<0.000000e+00> : vector<2x32xf32>
    %41 = tpu.matmul %35, %40, %cst_32 {dimension_numbers = #tpu.dot_dimension_numbers<[1], [0], [0], [1], [0, 0, 1, 1], [], []>} : vector<2x32xbf16>, vector<32x32xbf16>, vector<2x32xf32> -> vector<2x32xf32>
    %c2_33 = arith.constant 2 : index
    %c0_34 = arith.constant 0 : index
    %c0_35 = arith.constant 0 : index
    %42 = vector.load %arg3[%c2_33, %c0_34, %c0_35] : memref<3x32x32xbf16, #tpu.memory_space<vmem>>, vector<1x32x32xbf16>
    %43 = vector.shape_cast %42 : vector<1x32x32xbf16> to vector<32x32xbf16>
    %cst_36 = arith.constant dense<0.000000e+00> : vector<2x32xf32>
    %44 = tpu.matmul %35, %43, %cst_36 {dimension_numbers = #tpu.dot_dimension_numbers<[1], [0], [0], [1], [0, 0, 1, 1], [], []>} : vector<2x32xbf16>, vector<32x32xbf16>, vector<2x32xf32> -> vector<2x32xf32>
    %45 = vector.extract_strided_slice %14 {offsets = [0, 0, 0], sizes = [2, 1, 32], strides = [1, 1, 1]} : vector<2x8x32xf32> to vector<2x1x32xf32>
    %46 = vector.shape_cast %45 : vector<2x1x32xf32> to vector<2x32xf32>
    %47 = arith.addf %46, %38 : vector<2x32xf32>
    %cst_37 = arith.constant 5.000000e-01 : f32
    %48 = vector.broadcast %cst_37 : f32 to vector<2x32xf32>
    %49 = arith.mulf %48, %47 : vector<2x32xf32>
    %50 = math.tanh %49 : vector<2x32xf32>
    %cst_38 = arith.constant 5.000000e-01 : f32
    %51 = vector.broadcast %cst_38 : f32 to vector<2x32xf32>
    %52 = arith.mulf %51, %50 : vector<2x32xf32>
    %cst_39 = arith.constant 5.000000e-01 : f32
    %53 = vector.broadcast %cst_39 : f32 to vector<2x32xf32>
    %54 = arith.addf %52, %53 : vector<2x32xf32>
    %55 = vector.extract_strided_slice %23 {offsets = [0, 0, 0], sizes = [2, 1, 32], strides = [1, 1, 1]} : vector<2x8x32xf32> to vector<2x1x32xf32>
    %56 = vector.shape_cast %55 : vector<2x1x32xf32> to vector<2x32xf32>
    %57 = arith.addf %56, %41 : vector<2x32xf32>
    %cst_40 = arith.constant 5.000000e-01 : f32
    %58 = vector.broadcast %cst_40 : f32 to vector<2x32xf32>
    %59 = arith.mulf %58, %57 : vector<2x32xf32>
    %60 = math.tanh %59 : vector<2x32xf32>
    %cst_41 = arith.constant 5.000000e-01 : f32
    %61 = vector.broadcast %cst_41 : f32 to vector<2x32xf32>
    %62 = arith.mulf %61, %60 : vector<2x32xf32>
    %cst_42 = arith.constant 5.000000e-01 : f32
    %63 = vector.broadcast %cst_42 : f32 to vector<2x32xf32>
    %64 = arith.addf %62, %63 : vector<2x32xf32>
    %65 = vector.extract_strided_slice %32 {offsets = [0, 0, 0], sizes = [2, 1, 32], strides = [1, 1, 1]} : vector<2x8x32xf32> to vector<2x1x32xf32>
    %66 = vector.shape_cast %65 : vector<2x1x32xf32> to vector<2x32xf32>
    %67 = vector.broadcast %33 : vector<1x32xf32> to vector<2x32xf32>
    %68 = arith.addf %44, %67 : vector<2x32xf32>
    %69 = arith.mulf %54, %68 : vector<2x32xf32>
    %70 = arith.addf %66, %69 : vector<2x32xf32>
    %71 = math.tanh %70 : vector<2x32xf32>
    %72 = arith.subf %34, %71 : vector<2x32xf32>
    %73 = arith.mulf %64, %72 : vector<2x32xf32>
    %74 = arith.addf %71, %73 : vector<2x32xf32>
    %75 = vector.shape_cast %74 : vector<2x32xf32> to vector<2x1x32xf32>
    %c0_43 = arith.constant 0 : index
    %c0_44 = arith.constant 0 : index
    %c0_45 = arith.constant 0 : index
    %76 = vector.load %arg7[%c0_43, %c0_44, %c0_45] : memref<2x8x32xf32, #tpu.memory_space<vmem>>, vector<2x1x32xf32>
    tpu.vector_store %arg7[%c0_43, %c0_44, %c0_45], %75 {strides = array<i32>} : memref<2x8x32xf32, #tpu.memory_space<vmem>>, vector<2x1x32xf32>,
    %77 = arith.truncf %74 : vector<2x32xf32> to vector<2x32xbf16>
    %c0_46 = arith.constant 0 : index
    %c0_47 = arith.constant 0 : index
    %c0_48 = arith.constant 0 : index
    %78 = vector.load %arg3[%c0_46, %c0_47, %c0_48] : memref<3x32x32xbf16, #tpu.memory_space<vmem>>, vector<1x32x32xbf16>
    %79 = vector.shape_cast %78 : vector<1x32x32xbf16> to vector<32x32xbf16>
    %cst_49 = arith.constant dense<0.000000e+00> : vector<2x32xf32>
    %80 = tpu.matmul %77, %79, %cst_49 {dimension_numbers = #tpu.dot_dimension_numbers<[1], [0], [0], [1], [0, 0, 1, 1], [], []>} : vector<2x32xbf16>, vector<32x32xbf16>, vector<2x32xf32> -> vector<2x32xf32>
    %c1_50 = arith.constant 1 : index
    %c0_51 = arith.constant 0 : index
    %c0_52 = arith.constant 0 : index
    %81 = vector.load %arg3[%c1_50, %c0_51, %c0_52] : memref<3x32x32xbf16, #tpu.memory_space<vmem>>, vector<1x32x32xbf16>
    %82 = vector.shape_cast %81 : vector<1x32x32xbf16> to vector<32x32xbf16>
    %cst_53 = arith.constant dense<0.000000e+00> : vector<2x32xf32>
    %83 = tpu.matmul %77, %82, %cst_53 {dimension_numbers = #tpu.dot_dimension_numbers<[1], [0], [0], [1], [0, 0, 1, 1], [], []>} : vector<2x32xbf16>, vector<32x32xbf16>, vector<2x32xf32> -> vector<2x32xf32>
    %c2_54 = arith.constant 2 : index
    %c0_55 = arith.constant 0 : index
    %c0_56 = arith.constant 0 : index
    %84 = vector.load %arg3[%c2_54, %c0_55, %c0_56] : memref<3x32x32xbf16, #tpu.memory_space<vmem>>, vector<1x32x32xbf16>
    %85 = vector.shape_cast %84 : vector<1x32x32xbf16> to vector<32x32xbf16>
    %cst_57 = arith.constant dense<0.000000e+00> : vector<2x32xf32>
    %86 = tpu.matmul %77, %85, %cst_57 {dimension_numbers = #tpu.dot_dimension_numbers<[1], [0], [0], [1], [0, 0, 1, 1], [], []>} : vector<2x32xbf16>, vector<32x32xbf16>, vector<2x32xf32> -> vector<2x32xf32>
    %87 = vector.extract_strided_slice %14 {offsets = [0, 1, 0], sizes = [2, 1, 32], strides = [1, 1, 1]} : vector<2x8x32xf32> to vector<2x1x32xf32>
    %88 = vector.shape_cast %87 : vector<2x1x32xf32> to vector<2x32xf32>
    %89 = arith.addf %88, %80 : vector<2x32xf32>
    %cst_58 = arith.constant 5.000000e-01 : f32
    %90 = vector.broadcast %cst_58 : f32 to vector<2x32xf32>
    %91 = arith.mulf %90, %89 : vector<2x32xf32>
    %92 = math.tanh %91 : vector<2x32xf32>
    %cst_59 = arith.constant 5.000000e-01 : f32
    %93 = vector.broadcast %cst_59 : f32 to vector<2x32xf32>
    %94 = arith.mulf %93, %92 : vector<2x32xf32>
    %cst_60 = arith.constant 5.000000e-01 : f32
    %95 = vector.broadcast %cst_60 : f32 to vector<2x32xf32>
    %96 = arith.addf %94, %95 : vector<2x32xf32>
    %97 = vector.extract_strided_slice %23 {offsets = [0, 1, 0], sizes = [2, 1, 32], strides = [1, 1, 1]} : vector<2x8x32xf32> to vector<2x1x32xf32>
    %98 = vector.shape_cast %97 : vector<2x1x32xf32> to vector<2x32xf32>
    %99 = arith.addf %98, %83 : vector<2x32xf32>
    %cst_61 = arith.constant 5.000000e-01 : f32
    %100 = vector.broadcast %cst_61 : f32 to vector<2x32xf32>
    %101 = arith.mulf %100, %99 : vector<2x32xf32>
    %102 = math.tanh %101 : vector<2x32xf32>
    %cst_62 = arith.constant 5.000000e-01 : f32
    %103 = vector.broadcast %cst_62 : f32 to vector<2x32xf32>
    %104 = arith.mulf %103, %102 : vector<2x32xf32>
    %cst_63 = arith.constant 5.000000e-01 : f32
    %105 = vector.broadcast %cst_63 : f32 to vector<2x32xf32>
    %106 = arith.addf %104, %105 : vector<2x32xf32>
    %107 = vector.extract_strided_slice %32 {offsets = [0, 1, 0], sizes = [2, 1, 32], strides = [1, 1, 1]} : vector<2x8x32xf32> to vector<2x1x32xf32>
    %108 = vector.shape_cast %107 : vector<2x1x32xf32> to vector<2x32xf32>
    %109 = vector.broadcast %33 : vector<1x32xf32> to vector<2x32xf32>
    %110 = arith.addf %86, %109 : vector<2x32xf32>
    %111 = arith.mulf %96, %110 : vector<2x32xf32>
    %112 = arith.addf %108, %111 : vector<2x32xf32>
    %113 = math.tanh %112 : vector<2x32xf32>
    %114 = arith.subf %74, %113 : vector<2x32xf32>
    %115 = arith.mulf %106, %114 : vector<2x32xf32>
    %116 = arith.addf %113, %115 : vector<2x32xf32>
    %117 = vector.shape_cast %116 : vector<2x32xf32> to vector<2x1x32xf32>
    %c0_64 = arith.constant 0 : index
    %c1_65 = arith.constant 1 : index
    %c0_66 = arith.constant 0 : index
    %118 = vector.load %arg7[%c0_64, %c1_65, %c0_66] : memref<2x8x32xf32, #tpu.memory_space<vmem>>, vector<2x1x32xf32>
    tpu.vector_store %arg7[%c0_64, %c1_65, %c0_66], %117 {strides = array<i32>} : memref<2x8x32xf32, #tpu.memory_space<vmem>>, vector<2x1x32xf32>,
    %119 = arith.truncf %116 : vector<2x32xf32> to vector<2x32xbf16>
    %c0_67 = arith.constant 0 : index
    %c0_68 = arith.constant 0 : index
    %c0_69 = arith.constant 0 : index
    %120 = vector.load %arg3[%c0_67, %c0_68, %c0_69] : memref<3x32x32xbf16, #tpu.memory_space<vmem>>, vector<1x32x32xbf16>
    %121 = vector.shape_cast %120 : vector<1x32x32xbf16> to vector<32x32xbf16>
    %cst_70 = arith.constant dense<0.000000e+00> : vector<2x32xf32>
    %122 = tpu.matmul %119, %121, %cst_70 {dimension_numbers = #tpu.dot_dimension_numbers<[1], [0], [0], [1], [0, 0, 1, 1], [], []>} : vector<2x32xbf16>, vector<32x32xbf16>, vector<2x32xf32> -> vector<2x32xf32>
    %c1_71 = arith.constant 1 : index
    %c0_72 = arith.constant 0 : index
    %c0_73 = arith.constant 0 : index
    %123 = vector.load %arg3[%c1_71, %c0_72, %c0_73] : memref<3x32x32xbf16, #tpu.memory_space<vmem>>, vector<1x32x32xbf16>
    %124 = vector.shape_cast %123 : vector<1x32x32xbf16> to vector<32x32xbf16>
    %cst_74 = arith.constant dense<0.000000e+00> : vector<2x32xf32>
    %125 = tpu.matmul %119, %124, %cst_74 {dimension_numbers = #tpu.dot_dimension_numbers<[1], [0], [0], [1], [0, 0, 1, 1], [], []>} : vector<2x32xbf16>, vector<32x32xbf16>, vector<2x32xf32> -> vector<2x32xf32>
    %c2_75 = arith.constant 2 : index
    %c0_76 = arith.constant 0 : index
    %c0_77 = arith.constant 0 : index
    %126 = vector.load %arg3[%c2_75, %c0_76, %c0_77] : memref<3x32x32xbf16, #tpu.memory_space<vmem>>, vector<1x32x32xbf16>
    %127 = vector.shape_cast %126 : vector<1x32x32xbf16> to vector<32x32xbf16>
    %cst_78 = arith.constant dense<0.000000e+00> : vector<2x32xf32>
    %128 = tpu.matmul %119, %127, %cst_78 {dimension_numbers = #tpu.dot_dimension_numbers<[1], [0], [0], [1], [0, 0, 1, 1], [], []>} : vector<2x32xbf16>, vector<32x32xbf16>, vector<2x32xf32> -> vector<2x32xf32>
    %129 = vector.extract_strided_slice %14 {offsets = [0, 2, 0], sizes = [2, 1, 32], strides = [1, 1, 1]} : vector<2x8x32xf32> to vector<2x1x32xf32>
    %130 = vector.shape_cast %129 : vector<2x1x32xf32> to vector<2x32xf32>
    %131 = arith.addf %130, %122 : vector<2x32xf32>
    %cst_79 = arith.constant 5.000000e-01 : f32
    %132 = vector.broadcast %cst_79 : f32 to vector<2x32xf32>
    %133 = arith.mulf %132, %131 : vector<2x32xf32>
    %134 = math.tanh %133 : vector<2x32xf32>
    %cst_80 = arith.constant 5.000000e-01 : f32
    %135 = vector.broadcast %cst_80 : f32 to vector<2x32xf32>
    %136 = arith.mulf %135, %134 : vector<2x32xf32>
    %cst_81 = arith.constant 5.000000e-01 : f32
    %137 = vector.broadcast %cst_81 : f32 to vector<2x32xf32>
    %138 = arith.addf %136, %137 : vector<2x32xf32>
    %139 = vector.extract_strided_slice %23 {offsets = [0, 2, 0], sizes = [2, 1, 32], strides = [1, 1, 1]} : vector<2x8x32xf32> to vector<2x1x32xf32>
    %140 = vector.shape_cast %139 : vector<2x1x32xf32> to vector<2x32xf32>
    %141 = arith.addf %140, %125 : vector<2x32xf32>
    %cst_82 = arith.constant 5.000000e-01 : f32
    %142 = vector.broadcast %cst_82 : f32 to vector<2x32xf32>
    %143 = arith.mulf %142, %141 : vector<2x32xf32>
    %144 = math.tanh %143 : vector<2x32xf32>
    %cst_83 = arith.constant 5.000000e-01 : f32
    %145 = vector.broadcast %cst_83 : f32 to vector<2x32xf32>
    %146 = arith.mulf %145, %144 : vector<2x32xf32>
    %cst_84 = arith.constant 5.000000e-01 : f32
    %147 = vector.broadcast %cst_84 : f32 to vector<2x32xf32>
    %148 = arith.addf %146, %147 : vector<2x32xf32>
    %149 = vector.extract_strided_slice %32 {offsets = [0, 2, 0], sizes = [2, 1, 32], strides = [1, 1, 1]} : vector<2x8x32xf32> to vector<2x1x32xf32>
    %150 = vector.shape_cast %149 : vector<2x1x32xf32> to vector<2x32xf32>
    %151 = vector.broadcast %33 : vector<1x32xf32> to vector<2x32xf32>
    %152 = arith.addf %128, %151 : vector<2x32xf32>
    %153 = arith.mulf %138, %152 : vector<2x32xf32>
    %154 = arith.addf %150, %153 : vector<2x32xf32>
    %155 = math.tanh %154 : vector<2x32xf32>
    %156 = arith.subf %116, %155 : vector<2x32xf32>
    %157 = arith.mulf %148, %156 : vector<2x32xf32>
    %158 = arith.addf %155, %157 : vector<2x32xf32>
    %159 = vector.shape_cast %158 : vector<2x32xf32> to vector<2x1x32xf32>
    %c0_85 = arith.constant 0 : index
    %c2_86 = arith.constant 2 : index
    %c0_87 = arith.constant 0 : index
    %160 = vector.load %arg7[%c0_85, %c2_86, %c0_87] : memref<2x8x32xf32, #tpu.memory_space<vmem>>, vector<2x1x32xf32>
    tpu.vector_store %arg7[%c0_85, %c2_86, %c0_87], %159 {strides = array<i32>} : memref<2x8x32xf32, #tpu.memory_space<vmem>>, vector<2x1x32xf32>,
    %161 = arith.truncf %158 : vector<2x32xf32> to vector<2x32xbf16>
    %c0_88 = arith.constant 0 : index
    %c0_89 = arith.constant 0 : index
    %c0_90 = arith.constant 0 : index
    %162 = vector.load %arg3[%c0_88, %c0_89, %c0_90] : memref<3x32x32xbf16, #tpu.memory_space<vmem>>, vector<1x32x32xbf16>
    %163 = vector.shape_cast %162 : vector<1x32x32xbf16> to vector<32x32xbf16>
    %cst_91 = arith.constant dense<0.000000e+00> : vector<2x32xf32>
    %164 = tpu.matmul %161, %163, %cst_91 {dimension_numbers = #tpu.dot_dimension_numbers<[1], [0], [0], [1], [0, 0, 1, 1], [], []>} : vector<2x32xbf16>, vector<32x32xbf16>, vector<2x32xf32> -> vector<2x32xf32>
    %c1_92 = arith.constant 1 : index
    %c0_93 = arith.constant 0 : index
    %c0_94 = arith.constant 0 : index
    %165 = vector.load %arg3[%c1_92, %c0_93, %c0_94] : memref<3x32x32xbf16, #tpu.memory_space<vmem>>, vector<1x32x32xbf16>
    %166 = vector.shape_cast %165 : vector<1x32x32xbf16> to vector<32x32xbf16>
    %cst_95 = arith.constant dense<0.000000e+00> : vector<2x32xf32>
    %167 = tpu.matmul %161, %166, %cst_95 {dimension_numbers = #tpu.dot_dimension_numbers<[1], [0], [0], [1], [0, 0, 1, 1], [], []>} : vector<2x32xbf16>, vector<32x32xbf16>, vector<2x32xf32> -> vector<2x32xf32>
    %c2_96 = arith.constant 2 : index
    %c0_97 = arith.constant 0 : index
    %c0_98 = arith.constant 0 : index
    %168 = vector.load %arg3[%c2_96, %c0_97, %c0_98] : memref<3x32x32xbf16, #tpu.memory_space<vmem>>, vector<1x32x32xbf16>
    %169 = vector.shape_cast %168 : vector<1x32x32xbf16> to vector<32x32xbf16>
    %cst_99 = arith.constant dense<0.000000e+00> : vector<2x32xf32>
    %170 = tpu.matmul %161, %169, %cst_99 {dimension_numbers = #tpu.dot_dimension_numbers<[1], [0], [0], [1], [0, 0, 1, 1], [], []>} : vector<2x32xbf16>, vector<32x32xbf16>, vector<2x32xf32> -> vector<2x32xf32>
    %171 = vector.extract_strided_slice %14 {offsets = [0, 3, 0], sizes = [2, 1, 32], strides = [1, 1, 1]} : vector<2x8x32xf32> to vector<2x1x32xf32>
    %172 = vector.shape_cast %171 : vector<2x1x32xf32> to vector<2x32xf32>
    %173 = arith.addf %172, %164 : vector<2x32xf32>
    %cst_100 = arith.constant 5.000000e-01 : f32
    %174 = vector.broadcast %cst_100 : f32 to vector<2x32xf32>
    %175 = arith.mulf %174, %173 : vector<2x32xf32>
    %176 = math.tanh %175 : vector<2x32xf32>
    %cst_101 = arith.constant 5.000000e-01 : f32
    %177 = vector.broadcast %cst_101 : f32 to vector<2x32xf32>
    %178 = arith.mulf %177, %176 : vector<2x32xf32>
    %cst_102 = arith.constant 5.000000e-01 : f32
    %179 = vector.broadcast %cst_102 : f32 to vector<2x32xf32>
    %180 = arith.addf %178, %179 : vector<2x32xf32>
    %181 = vector.extract_strided_slice %23 {offsets = [0, 3, 0], sizes = [2, 1, 32], strides = [1, 1, 1]} : vector<2x8x32xf32> to vector<2x1x32xf32>
    %182 = vector.shape_cast %181 : vector<2x1x32xf32> to vector<2x32xf32>
    %183 = arith.addf %182, %167 : vector<2x32xf32>
    %cst_103 = arith.constant 5.000000e-01 : f32
    %184 = vector.broadcast %cst_103 : f32 to vector<2x32xf32>
    %185 = arith.mulf %184, %183 : vector<2x32xf32>
    %186 = math.tanh %185 : vector<2x32xf32>
    %cst_104 = arith.constant 5.000000e-01 : f32
    %187 = vector.broadcast %cst_104 : f32 to vector<2x32xf32>
    %188 = arith.mulf %187, %186 : vector<2x32xf32>
    %cst_105 = arith.constant 5.000000e-01 : f32
    %189 = vector.broadcast %cst_105 : f32 to vector<2x32xf32>
    %190 = arith.addf %188, %189 : vector<2x32xf32>
    %191 = vector.extract_strided_slice %32 {offsets = [0, 3, 0], sizes = [2, 1, 32], strides = [1, 1, 1]} : vector<2x8x32xf32> to vector<2x1x32xf32>
    %192 = vector.shape_cast %191 : vector<2x1x32xf32> to vector<2x32xf32>
    %193 = vector.broadcast %33 : vector<1x32xf32> to vector<2x32xf32>
    %194 = arith.addf %170, %193 : vector<2x32xf32>
    %195 = arith.mulf %180, %194 : vector<2x32xf32>
    %196 = arith.addf %192, %195 : vector<2x32xf32>
    %197 = math.tanh %196 : vector<2x32xf32>
    %198 = arith.subf %158, %197 : vector<2x32xf32>
    %199 = arith.mulf %190, %198 : vector<2x32xf32>
    %200 = arith.addf %197, %199 : vector<2x32xf32>
    %201 = vector.shape_cast %200 : vector<2x32xf32> to vector<2x1x32xf32>
    %c0_106 = arith.constant 0 : index
    %c3 = arith.constant 3 : index
    %c0_107 = arith.constant 0 : index
    %202 = vector.load %arg7[%c0_106, %c3, %c0_107] : memref<2x8x32xf32, #tpu.memory_space<vmem>>, vector<2x1x32xf32>
    tpu.vector_store %arg7[%c0_106, %c3, %c0_107], %201 {strides = array<i32>} : memref<2x8x32xf32, #tpu.memory_space<vmem>>, vector<2x1x32xf32>,
    %203 = arith.truncf %200 : vector<2x32xf32> to vector<2x32xbf16>
    %c0_108 = arith.constant 0 : index
    %c0_109 = arith.constant 0 : index
    %c0_110 = arith.constant 0 : index
    %204 = vector.load %arg3[%c0_108, %c0_109, %c0_110] : memref<3x32x32xbf16, #tpu.memory_space<vmem>>, vector<1x32x32xbf16>
    %205 = vector.shape_cast %204 : vector<1x32x32xbf16> to vector<32x32xbf16>
    %cst_111 = arith.constant dense<0.000000e+00> : vector<2x32xf32>
    %206 = tpu.matmul %203, %205, %cst_111 {dimension_numbers = #tpu.dot_dimension_numbers<[1], [0], [0], [1], [0, 0, 1, 1], [], []>} : vector<2x32xbf16>, vector<32x32xbf16>, vector<2x32xf32> -> vector<2x32xf32>
    %c1_112 = arith.constant 1 : index
    %c0_113 = arith.constant 0 : index
    %c0_114 = arith.constant 0 : index
    %207 = vector.load %arg3[%c1_112, %c0_113, %c0_114] : memref<3x32x32xbf16, #tpu.memory_space<vmem>>, vector<1x32x32xbf16>
    %208 = vector.shape_cast %207 : vector<1x32x32xbf16> to vector<32x32xbf16>
    %cst_115 = arith.constant dense<0.000000e+00> : vector<2x32xf32>
    %209 = tpu.matmul %203, %208, %cst_115 {dimension_numbers = #tpu.dot_dimension_numbers<[1], [0], [0], [1], [0, 0, 1, 1], [], []>} : vector<2x32xbf16>, vector<32x32xbf16>, vector<2x32xf32> -> vector<2x32xf32>
    %c2_116 = arith.constant 2 : index
    %c0_117 = arith.constant 0 : index
    %c0_118 = arith.constant 0 : index
    %210 = vector.load %arg3[%c2_116, %c0_117, %c0_118] : memref<3x32x32xbf16, #tpu.memory_space<vmem>>, vector<1x32x32xbf16>
    %211 = vector.shape_cast %210 : vector<1x32x32xbf16> to vector<32x32xbf16>
    %cst_119 = arith.constant dense<0.000000e+00> : vector<2x32xf32>
    %212 = tpu.matmul %203, %211, %cst_119 {dimension_numbers = #tpu.dot_dimension_numbers<[1], [0], [0], [1], [0, 0, 1, 1], [], []>} : vector<2x32xbf16>, vector<32x32xbf16>, vector<2x32xf32> -> vector<2x32xf32>
    %213 = vector.extract_strided_slice %14 {offsets = [0, 4, 0], sizes = [2, 1, 32], strides = [1, 1, 1]} : vector<2x8x32xf32> to vector<2x1x32xf32>
    %214 = vector.shape_cast %213 : vector<2x1x32xf32> to vector<2x32xf32>
    %215 = arith.addf %214, %206 : vector<2x32xf32>
    %cst_120 = arith.constant 5.000000e-01 : f32
    %216 = vector.broadcast %cst_120 : f32 to vector<2x32xf32>
    %217 = arith.mulf %216, %215 : vector<2x32xf32>
    %218 = math.tanh %217 : vector<2x32xf32>
    %cst_121 = arith.constant 5.000000e-01 : f32
    %219 = vector.broadcast %cst_121 : f32 to vector<2x32xf32>
    %220 = arith.mulf %219, %218 : vector<2x32xf32>
    %cst_122 = arith.constant 5.000000e-01 : f32
    %221 = vector.broadcast %cst_122 : f32 to vector<2x32xf32>
    %222 = arith.addf %220, %221 : vector<2x32xf32>
    %223 = vector.extract_strided_slice %23 {offsets = [0, 4, 0], sizes = [2, 1, 32], strides = [1, 1, 1]} : vector<2x8x32xf32> to vector<2x1x32xf32>
    %224 = vector.shape_cast %223 : vector<2x1x32xf32> to vector<2x32xf32>
    %225 = arith.addf %224, %209 : vector<2x32xf32>
    %cst_123 = arith.constant 5.000000e-01 : f32
    %226 = vector.broadcast %cst_123 : f32 to vector<2x32xf32>
    %227 = arith.mulf %226, %225 : vector<2x32xf32>
    %228 = math.tanh %227 : vector<2x32xf32>
    %cst_124 = arith.constant 5.000000e-01 : f32
    %229 = vector.broadcast %cst_124 : f32 to vector<2x32xf32>
    %230 = arith.mulf %229, %228 : vector<2x32xf32>
    %cst_125 = arith.constant 5.000000e-01 : f32
    %231 = vector.broadcast %cst_125 : f32 to vector<2x32xf32>
    %232 = arith.addf %230, %231 : vector<2x32xf32>
    %233 = vector.extract_strided_slice %32 {offsets = [0, 4, 0], sizes = [2, 1, 32], strides = [1, 1, 1]} : vector<2x8x32xf32> to vector<2x1x32xf32>
    %234 = vector.shape_cast %233 : vector<2x1x32xf32> to vector<2x32xf32>
    %235 = vector.broadcast %33 : vector<1x32xf32> to vector<2x32xf32>
    %236 = arith.addf %212, %235 : vector<2x32xf32>
    %237 = arith.mulf %222, %236 : vector<2x32xf32>
    %238 = arith.addf %234, %237 : vector<2x32xf32>
    %239 = math.tanh %238 : vector<2x32xf32>
    %240 = arith.subf %200, %239 : vector<2x32xf32>
    %241 = arith.mulf %232, %240 : vector<2x32xf32>
    %242 = arith.addf %239, %241 : vector<2x32xf32>
    %243 = vector.shape_cast %242 : vector<2x32xf32> to vector<2x1x32xf32>
    %c0_126 = arith.constant 0 : index
    %c4 = arith.constant 4 : index
    %c0_127 = arith.constant 0 : index
    %244 = vector.load %arg7[%c0_126, %c4, %c0_127] : memref<2x8x32xf32, #tpu.memory_space<vmem>>, vector<2x1x32xf32>
    tpu.vector_store %arg7[%c0_126, %c4, %c0_127], %243 {strides = array<i32>} : memref<2x8x32xf32, #tpu.memory_space<vmem>>, vector<2x1x32xf32>,
    %245 = arith.truncf %242 : vector<2x32xf32> to vector<2x32xbf16>
    %c0_128 = arith.constant 0 : index
    %c0_129 = arith.constant 0 : index
    %c0_130 = arith.constant 0 : index
    %246 = vector.load %arg3[%c0_128, %c0_129, %c0_130] : memref<3x32x32xbf16, #tpu.memory_space<vmem>>, vector<1x32x32xbf16>
    %247 = vector.shape_cast %246 : vector<1x32x32xbf16> to vector<32x32xbf16>
    %cst_131 = arith.constant dense<0.000000e+00> : vector<2x32xf32>
    %248 = tpu.matmul %245, %247, %cst_131 {dimension_numbers = #tpu.dot_dimension_numbers<[1], [0], [0], [1], [0, 0, 1, 1], [], []>} : vector<2x32xbf16>, vector<32x32xbf16>, vector<2x32xf32> -> vector<2x32xf32>
    %c1_132 = arith.constant 1 : index
    %c0_133 = arith.constant 0 : index
    %c0_134 = arith.constant 0 : index
    %249 = vector.load %arg3[%c1_132, %c0_133, %c0_134] : memref<3x32x32xbf16, #tpu.memory_space<vmem>>, vector<1x32x32xbf16>
    %250 = vector.shape_cast %249 : vector<1x32x32xbf16> to vector<32x32xbf16>
    %cst_135 = arith.constant dense<0.000000e+00> : vector<2x32xf32>
    %251 = tpu.matmul %245, %250, %cst_135 {dimension_numbers = #tpu.dot_dimension_numbers<[1], [0], [0], [1], [0, 0, 1, 1], [], []>} : vector<2x32xbf16>, vector<32x32xbf16>, vector<2x32xf32> -> vector<2x32xf32>
    %c2_136 = arith.constant 2 : index
    %c0_137 = arith.constant 0 : index
    %c0_138 = arith.constant 0 : index
    %252 = vector.load %arg3[%c2_136, %c0_137, %c0_138] : memref<3x32x32xbf16, #tpu.memory_space<vmem>>, vector<1x32x32xbf16>
    %253 = vector.shape_cast %252 : vector<1x32x32xbf16> to vector<32x32xbf16>
    %cst_139 = arith.constant dense<0.000000e+00> : vector<2x32xf32>
    %254 = tpu.matmul %245, %253, %cst_139 {dimension_numbers = #tpu.dot_dimension_numbers<[1], [0], [0], [1], [0, 0, 1, 1], [], []>} : vector<2x32xbf16>, vector<32x32xbf16>, vector<2x32xf32> -> vector<2x32xf32>
    %255 = vector.extract_strided_slice %14 {offsets = [0, 5, 0], sizes = [2, 1, 32], strides = [1, 1, 1]} : vector<2x8x32xf32> to vector<2x1x32xf32>
    %256 = vector.shape_cast %255 : vector<2x1x32xf32> to vector<2x32xf32>
    %257 = arith.addf %256, %248 : vector<2x32xf32>
    %cst_140 = arith.constant 5.000000e-01 : f32
    %258 = vector.broadcast %cst_140 : f32 to vector<2x32xf32>
    %259 = arith.mulf %258, %257 : vector<2x32xf32>
    %260 = math.tanh %259 : vector<2x32xf32>
    %cst_141 = arith.constant 5.000000e-01 : f32
    %261 = vector.broadcast %cst_141 : f32 to vector<2x32xf32>
    %262 = arith.mulf %261, %260 : vector<2x32xf32>
    %cst_142 = arith.constant 5.000000e-01 : f32
    %263 = vector.broadcast %cst_142 : f32 to vector<2x32xf32>
    %264 = arith.addf %262, %263 : vector<2x32xf32>
    %265 = vector.extract_strided_slice %23 {offsets = [0, 5, 0], sizes = [2, 1, 32], strides = [1, 1, 1]} : vector<2x8x32xf32> to vector<2x1x32xf32>
    %266 = vector.shape_cast %265 : vector<2x1x32xf32> to vector<2x32xf32>
    %267 = arith.addf %266, %251 : vector<2x32xf32>
    %cst_143 = arith.constant 5.000000e-01 : f32
    %268 = vector.broadcast %cst_143 : f32 to vector<2x32xf32>
    %269 = arith.mulf %268, %267 : vector<2x32xf32>
    %270 = math.tanh %269 : vector<2x32xf32>
    %cst_144 = arith.constant 5.000000e-01 : f32
    %271 = vector.broadcast %cst_144 : f32 to vector<2x32xf32>
    %272 = arith.mulf %271, %270 : vector<2x32xf32>
    %cst_145 = arith.constant 5.000000e-01 : f32
    %273 = vector.broadcast %cst_145 : f32 to vector<2x32xf32>
    %274 = arith.addf %272, %273 : vector<2x32xf32>
    %275 = vector.extract_strided_slice %32 {offsets = [0, 5, 0], sizes = [2, 1, 32], strides = [1, 1, 1]} : vector<2x8x32xf32> to vector<2x1x32xf32>
    %276 = vector.shape_cast %275 : vector<2x1x32xf32> to vector<2x32xf32>
    %277 = vector.broadcast %33 : vector<1x32xf32> to vector<2x32xf32>
    %278 = arith.addf %254, %277 : vector<2x32xf32>
    %279 = arith.mulf %264, %278 : vector<2x32xf32>
    %280 = arith.addf %276, %279 : vector<2x32xf32>
    %281 = math.tanh %280 : vector<2x32xf32>
    %282 = arith.subf %242, %281 : vector<2x32xf32>
    %283 = arith.mulf %274, %282 : vector<2x32xf32>
    %284 = arith.addf %281, %283 : vector<2x32xf32>
    %285 = vector.shape_cast %284 : vector<2x32xf32> to vector<2x1x32xf32>
    %c0_146 = arith.constant 0 : index
    %c5 = arith.constant 5 : index
    %c0_147 = arith.constant 0 : index
    %286 = vector.load %arg7[%c0_146, %c5, %c0_147] : memref<2x8x32xf32, #tpu.memory_space<vmem>>, vector<2x1x32xf32>
    tpu.vector_store %arg7[%c0_146, %c5, %c0_147], %285 {strides = array<i32>} : memref<2x8x32xf32, #tpu.memory_space<vmem>>, vector<2x1x32xf32>,
    %287 = arith.truncf %284 : vector<2x32xf32> to vector<2x32xbf16>
    %c0_148 = arith.constant 0 : index
    %c0_149 = arith.constant 0 : index
    %c0_150 = arith.constant 0 : index
    %288 = vector.load %arg3[%c0_148, %c0_149, %c0_150] : memref<3x32x32xbf16, #tpu.memory_space<vmem>>, vector<1x32x32xbf16>
    %289 = vector.shape_cast %288 : vector<1x32x32xbf16> to vector<32x32xbf16>
    %cst_151 = arith.constant dense<0.000000e+00> : vector<2x32xf32>
    %290 = tpu.matmul %287, %289, %cst_151 {dimension_numbers = #tpu.dot_dimension_numbers<[1], [0], [0], [1], [0, 0, 1, 1], [], []>} : vector<2x32xbf16>, vector<32x32xbf16>, vector<2x32xf32> -> vector<2x32xf32>
    %c1_152 = arith.constant 1 : index
    %c0_153 = arith.constant 0 : index
    %c0_154 = arith.constant 0 : index
    %291 = vector.load %arg3[%c1_152, %c0_153, %c0_154] : memref<3x32x32xbf16, #tpu.memory_space<vmem>>, vector<1x32x32xbf16>
    %292 = vector.shape_cast %291 : vector<1x32x32xbf16> to vector<32x32xbf16>
    %cst_155 = arith.constant dense<0.000000e+00> : vector<2x32xf32>
    %293 = tpu.matmul %287, %292, %cst_155 {dimension_numbers = #tpu.dot_dimension_numbers<[1], [0], [0], [1], [0, 0, 1, 1], [], []>} : vector<2x32xbf16>, vector<32x32xbf16>, vector<2x32xf32> -> vector<2x32xf32>
    %c2_156 = arith.constant 2 : index
    %c0_157 = arith.constant 0 : index
    %c0_158 = arith.constant 0 : index
    %294 = vector.load %arg3[%c2_156, %c0_157, %c0_158] : memref<3x32x32xbf16, #tpu.memory_space<vmem>>, vector<1x32x32xbf16>
    %295 = vector.shape_cast %294 : vector<1x32x32xbf16> to vector<32x32xbf16>
    %cst_159 = arith.constant dense<0.000000e+00> : vector<2x32xf32>
    %296 = tpu.matmul %287, %295, %cst_159 {dimension_numbers = #tpu.dot_dimension_numbers<[1], [0], [0], [1], [0, 0, 1, 1], [], []>} : vector<2x32xbf16>, vector<32x32xbf16>, vector<2x32xf32> -> vector<2x32xf32>
    %297 = vector.extract_strided_slice %14 {offsets = [0, 6, 0], sizes = [2, 1, 32], strides = [1, 1, 1]} : vector<2x8x32xf32> to vector<2x1x32xf32>
    %298 = vector.shape_cast %297 : vector<2x1x32xf32> to vector<2x32xf32>
    %299 = arith.addf %298, %290 : vector<2x32xf32>
    %cst_160 = arith.constant 5.000000e-01 : f32
    %300 = vector.broadcast %cst_160 : f32 to vector<2x32xf32>
    %301 = arith.mulf %300, %299 : vector<2x32xf32>
    %302 = math.tanh %301 : vector<2x32xf32>
    %cst_161 = arith.constant 5.000000e-01 : f32
    %303 = vector.broadcast %cst_161 : f32 to vector<2x32xf32>
    %304 = arith.mulf %303, %302 : vector<2x32xf32>
    %cst_162 = arith.constant 5.000000e-01 : f32
    %305 = vector.broadcast %cst_162 : f32 to vector<2x32xf32>
    %306 = arith.addf %304, %305 : vector<2x32xf32>
    %307 = vector.extract_strided_slice %23 {offsets = [0, 6, 0], sizes = [2, 1, 32], strides = [1, 1, 1]} : vector<2x8x32xf32> to vector<2x1x32xf32>
    %308 = vector.shape_cast %307 : vector<2x1x32xf32> to vector<2x32xf32>
    %309 = arith.addf %308, %293 : vector<2x32xf32>
    %cst_163 = arith.constant 5.000000e-01 : f32
    %310 = vector.broadcast %cst_163 : f32 to vector<2x32xf32>
    %311 = arith.mulf %310, %309 : vector<2x32xf32>
    %312 = math.tanh %311 : vector<2x32xf32>
    %cst_164 = arith.constant 5.000000e-01 : f32
    %313 = vector.broadcast %cst_164 : f32 to vector<2x32xf32>
    %314 = arith.mulf %313, %312 : vector<2x32xf32>
    %cst_165 = arith.constant 5.000000e-01 : f32
    %315 = vector.broadcast %cst_165 : f32 to vector<2x32xf32>
    %316 = arith.addf %314, %315 : vector<2x32xf32>
    %317 = vector.extract_strided_slice %32 {offsets = [0, 6, 0], sizes = [2, 1, 32], strides = [1, 1, 1]} : vector<2x8x32xf32> to vector<2x1x32xf32>
    %318 = vector.shape_cast %317 : vector<2x1x32xf32> to vector<2x32xf32>
    %319 = vector.broadcast %33 : vector<1x32xf32> to vector<2x32xf32>
    %320 = arith.addf %296, %319 : vector<2x32xf32>
    %321 = arith.mulf %306, %320 : vector<2x32xf32>
    %322 = arith.addf %318, %321 : vector<2x32xf32>
    %323 = math.tanh %322 : vector<2x32xf32>
    %324 = arith.subf %284, %323 : vector<2x32xf32>
    %325 = arith.mulf %316, %324 : vector<2x32xf32>
    %326 = arith.addf %323, %325 : vector<2x32xf32>
    %327 = vector.shape_cast %326 : vector<2x32xf32> to vector<2x1x32xf32>
    %c0_166 = arith.constant 0 : index
    %c6 = arith.constant 6 : index
    %c0_167 = arith.constant 0 : index
    %328 = vector.load %arg7[%c0_166, %c6, %c0_167] : memref<2x8x32xf32, #tpu.memory_space<vmem>>, vector<2x1x32xf32>
    tpu.vector_store %arg7[%c0_166, %c6, %c0_167], %327 {strides = array<i32>} : memref<2x8x32xf32, #tpu.memory_space<vmem>>, vector<2x1x32xf32>,
    %329 = arith.truncf %326 : vector<2x32xf32> to vector<2x32xbf16>
    %c0_168 = arith.constant 0 : index
    %c0_169 = arith.constant 0 : index
    %c0_170 = arith.constant 0 : index
    %330 = vector.load %arg3[%c0_168, %c0_169, %c0_170] : memref<3x32x32xbf16, #tpu.memory_space<vmem>>, vector<1x32x32xbf16>
    %331 = vector.shape_cast %330 : vector<1x32x32xbf16> to vector<32x32xbf16>
    %cst_171 = arith.constant dense<0.000000e+00> : vector<2x32xf32>
    %332 = tpu.matmul %329, %331, %cst_171 {dimension_numbers = #tpu.dot_dimension_numbers<[1], [0], [0], [1], [0, 0, 1, 1], [], []>} : vector<2x32xbf16>, vector<32x32xbf16>, vector<2x32xf32> -> vector<2x32xf32>
    %c1_172 = arith.constant 1 : index
    %c0_173 = arith.constant 0 : index
    %c0_174 = arith.constant 0 : index
    %333 = vector.load %arg3[%c1_172, %c0_173, %c0_174] : memref<3x32x32xbf16, #tpu.memory_space<vmem>>, vector<1x32x32xbf16>
    %334 = vector.shape_cast %333 : vector<1x32x32xbf16> to vector<32x32xbf16>
    %cst_175 = arith.constant dense<0.000000e+00> : vector<2x32xf32>
    %335 = tpu.matmul %329, %334, %cst_175 {dimension_numbers = #tpu.dot_dimension_numbers<[1], [0], [0], [1], [0, 0, 1, 1], [], []>} : vector<2x32xbf16>, vector<32x32xbf16>, vector<2x32xf32> -> vector<2x32xf32>
    %c2_176 = arith.constant 2 : index
    %c0_177 = arith.constant 0 : index
    %c0_178 = arith.constant 0 : index
    %336 = vector.load %arg3[%c2_176, %c0_177, %c0_178] : memref<3x32x32xbf16, #tpu.memory_space<vmem>>, vector<1x32x32xbf16>
    %337 = vector.shape_cast %336 : vector<1x32x32xbf16> to vector<32x32xbf16>
    %cst_179 = arith.constant dense<0.000000e+00> : vector<2x32xf32>
    %338 = tpu.matmul %329, %337, %cst_179 {dimension_numbers = #tpu.dot_dimension_numbers<[1], [0], [0], [1], [0, 0, 1, 1], [], []>} : vector<2x32xbf16>, vector<32x32xbf16>, vector<2x32xf32> -> vector<2x32xf32>
    %339 = vector.extract_strided_slice %14 {offsets = [0, 7, 0], sizes = [2, 1, 32], strides = [1, 1, 1]} : vector<2x8x32xf32> to vector<2x1x32xf32>
    %340 = vector.shape_cast %339 : vector<2x1x32xf32> to vector<2x32xf32>
    %341 = arith.addf %340, %332 : vector<2x32xf32>
    %cst_180 = arith.constant 5.000000e-01 : f32
    %342 = vector.broadcast %cst_180 : f32 to vector<2x32xf32>
    %343 = arith.mulf %342, %341 : vector<2x32xf32>
    %344 = math.tanh %343 : vector<2x32xf32>
    %cst_181 = arith.constant 5.000000e-01 : f32
    %345 = vector.broadcast %cst_181 : f32 to vector<2x32xf32>
    %346 = arith.mulf %345, %344 : vector<2x32xf32>
    %cst_182 = arith.constant 5.000000e-01 : f32
    %347 = vector.broadcast %cst_182 : f32 to vector<2x32xf32>
    %348 = arith.addf %346, %347 : vector<2x32xf32>
    %349 = vector.extract_strided_slice %23 {offsets = [0, 7, 0], sizes = [2, 1, 32], strides = [1, 1, 1]} : vector<2x8x32xf32> to vector<2x1x32xf32>
    %350 = vector.shape_cast %349 : vector<2x1x32xf32> to vector<2x32xf32>
    %351 = arith.addf %350, %335 : vector<2x32xf32>
    %cst_183 = arith.constant 5.000000e-01 : f32
    %352 = vector.broadcast %cst_183 : f32 to vector<2x32xf32>
    %353 = arith.mulf %352, %351 : vector<2x32xf32>
    %354 = math.tanh %353 : vector<2x32xf32>
    %cst_184 = arith.constant 5.000000e-01 : f32
    %355 = vector.broadcast %cst_184 : f32 to vector<2x32xf32>
    %356 = arith.mulf %355, %354 : vector<2x32xf32>
    %cst_185 = arith.constant 5.000000e-01 : f32
    %357 = vector.broadcast %cst_185 : f32 to vector<2x32xf32>
    %358 = arith.addf %356, %357 : vector<2x32xf32>
    %359 = vector.extract_strided_slice %32 {offsets = [0, 7, 0], sizes = [2, 1, 32], strides = [1, 1, 1]} : vector<2x8x32xf32> to vector<2x1x32xf32>
    %360 = vector.shape_cast %359 : vector<2x1x32xf32> to vector<2x32xf32>
    %361 = vector.broadcast %33 : vector<1x32xf32> to vector<2x32xf32>
    %362 = arith.addf %338, %361 : vector<2x32xf32>
    %363 = arith.mulf %348, %362 : vector<2x32xf32>
    %364 = arith.addf %360, %363 : vector<2x32xf32>
    %365 = math.tanh %364 : vector<2x32xf32>
    %366 = arith.subf %326, %365 : vector<2x32xf32>
    %367 = arith.mulf %358, %366 : vector<2x32xf32>
    %368 = arith.addf %365, %367 : vector<2x32xf32>
    %369 = vector.shape_cast %368 : vector<2x32xf32> to vector<2x1x32xf32>
    %c0_186 = arith.constant 0 : index
    %c7 = arith.constant 7 : index
    %c0_187 = arith.constant 0 : index
    %370 = vector.load %arg7[%c0_186, %c7, %c0_187] : memref<2x8x32xf32, #tpu.memory_space<vmem>>, vector<2x1x32xf32>
    tpu.vector_store %arg7[%c0_186, %c7, %c0_187], %369 {strides = array<i32>} : memref<2x8x32xf32, #tpu.memory_space<vmem>>, vector<2x1x32xf32>,
    %c0_188 = arith.constant 0 : index
    %c0_189 = arith.constant 0 : index
    %371 = vector.load %arg8[%c0_188, %c0_189] : memref<2x32xf32, #tpu.memory_space<vmem>>, vector<2x32xf32>
    tpu.vector_store %arg8[%c0_188, %c0_189], %368 {strides = array<i32>} : memref<2x32xf32, #tpu.memory_space<vmem>>, vector<2x32xf32>,
    return
  }
  func.func @transform_0(%arg0: i32) -> (i32, i32, i32) {
    %c0_i32 = arith.constant 0 : i32
    %c0_i32_0 = arith.constant 0 : i32
    %c0_i32_1 = arith.constant 0 : i32
    return %c0_i32, %arg0, %c0_i32_0 : i32, i32, i32
  }
  func.func @transform_1(%arg0: i32) -> (i32, i32, i32) {
    %c0_i32 = arith.constant 0 : i32
    %c0_i32_0 = arith.constant 0 : i32
    %c0_i32_1 = arith.constant 0 : i32
    %c0_i32_2 = arith.constant 0 : i32
    return %c0_i32, %c0_i32_0, %c0_i32_1 : i32, i32, i32
  }
  func.func @transform_2(%arg0: i32) -> (i32, i32, i32) {
    %c0_i32 = arith.constant 0 : i32
    %c0_i32_0 = arith.constant 0 : i32
    %c0_i32_1 = arith.constant 0 : i32
    %c0_i32_2 = arith.constant 0 : i32
    return %c0_i32, %c0_i32_0, %c0_i32_1 : i32, i32, i32
  }
  func.func @transform_3(%arg0: i32) -> (i32, i32, i32) {
    %c0_i32 = arith.constant 0 : i32
    %c0_i32_0 = arith.constant 0 : i32
    %c0_i32_1 = arith.constant 0 : i32
    %c0_i32_2 = arith.constant 0 : i32
    return %c0_i32, %c0_i32_0, %c0_i32_1 : i32, i32, i32
  }
  func.func @transform_4(%arg0: i32) -> (i32, i32) {
    %c0_i32 = arith.constant 0 : i32
    %c0_i32_0 = arith.constant 0 : i32
    %c0_i32_1 = arith.constant 0 : i32
    return %c0_i32, %c0_i32_0 : i32, i32
  }
  func.func @transform_5(%arg0: i32) -> (i32, i32) {
    %c0_i32 = arith.constant 0 : i32
    %c0_i32_0 = arith.constant 0 : i32
    %c0_i32_1 = arith.constant 0 : i32
    return %c0_i32, %c0_i32_0 : i32, i32
  }
  func.func @transform_6(%arg0: i32) -> (i32, i32, i32) {
    %c0_i32 = arith.constant 0 : i32
    %c0_i32_0 = arith.constant 0 : i32
    %c0_i32_1 = arith.constant 0 : i32
    return %c0_i32, %arg0, %c0_i32_0 : i32, i32, i32
  }
}

</mosaic_0001>

<llo_original>
// kernel: _lambda_.1
$region0: #{_lambda_.1}
  #allocation0 [shape = 'u32[]', space=smem, size = 0x4, offset = 0x4, fixed_abs, tag = 'smem constant byte address 0x4 - core index']
  #allocation1 [shape = 'u32[72,128]{1,0:T(1,128)}', space=vmem, size = 0x9000, scoped, tag = 'internal scratch']
  #allocation2 [shape = 'f32[2,32]{1,0:T(2,128)}', space=vmem, size = 0x400, scoped, tag = 'scratch operand']
  %s0 = inlined_call_operand.hbm [shape: f32[2,8,16], index: 0, kind: input, shape index: {}]
  %s1 = inlined_call_operand.hbm [shape: bf16[3,16,32], index: 1, kind: input, shape index: {}]
  %s2 = inlined_call_operand.hbm [shape: bf16[3,32,32], index: 2, kind: input, shape index: {}]
  %s3 = inlined_call_operand.vmem [shape: f32[3,1,32], index: 3, kind: input, shape index: {}]
  %s4 = inlined_call_operand.vmem [shape: f32[1,32], index: 4, kind: input, shape index: {}]
  %s5 = inlined_call_operand.vmem [shape: f32[2,32], index: 5, kind: input, shape index: {}]
  %s6 = inlined_call_operand.vmem [shape: f32[2,8,32], index: 6, kind: output, shape index: {}]
  %s7 = sld [smem:[#allocation0]]
  $region50: #{_lambda_.1} parent=0
    _
  %s9 = ssub.s32 1, %s7
  %s10 = scalar_select 0, %s9, %s7
  $region1: #{_lambda_.1} parent=0
    #allocation3 [shape = 'u8[8192]{0}', space=vmem, size = 0x2000, scoped, tag = 'input window, operand 0, single buffered']
    #allocation4 [shape = 's32[1]{0}', space=sflag, size = 0x4, scoped, tag = 'scoped memory for _lambda_.1']
    #allocation5 [shape = 'u8[12288]{0}', space=vmem, size = 0x3000, scoped, tag = 'input window, operand 1, single buffered']
    #allocation6 [shape = 's32[1]{0}', space=sflag, size = 0x4, scoped, tag = 'scoped memory for _lambda_.1']
    #allocation7 [shape = 'u8[24576]{0}', space=vmem, size = 0x6000, scoped, tag = 'input window, operand 2, single buffered']
    %11 = vsyncpa [#allocation4], 0
    %12 = vsyncpa [#allocation6], 0
    // Predicated region
    $region2: #{_lambda_.1} parent=1 // pred_check
      _
    $region3: #{_lambda_.1} parent=1 // pred_check_branch
      %14 = sbr.rel (0) target = $region5
    $region4: #{_lambda_.1} parent=1 // pred_region
      %16 = vsyncadd [#allocation4], 0
      %s17 = sshll.u32 %s0, 4
      %s18 = int_to_ptr.hbm [resolvable:$true] %s17
      %s19 = sshll.u32 [#allocation3], 4
      %s20 = int_to_ptr.vmem [resolvable:$true] %s19
      %25 = dma.hbm_to_vmem [thread:$0]  %s18, 256, %s20, [#allocation4], 128, 128, 8
    $region5: #{_lambda_.1} parent=1 // pred_fallthru
      _
    // Predicated region
    $region6: #{_lambda_.1} parent=1 // pred_check
      _
    $region7: #{_lambda_.1} parent=1 // pred_check_branch
      %27 = sbr.rel (0) target = $region9
    $region8: #{_lambda_.1} parent=1 // pred_region
      %29 = vsyncadd [#allocation6], 0
      %s30 = sshll.u32 %s1, 4
      %s31 = int_to_ptr.hbm [resolvable:$true] %s30
      %s32 = sshll.u32 [#allocation5], 4
      %s33 = int_to_ptr.vmem [resolvable:$true] %s32
      %38 = dma.hbm_to_vmem [thread:$0]  %s31, 384, %s33, [#allocation6], 64, 64, 4
    $region9: #{_lambda_.1} parent=1 // pred_fallthru
      _
    // Predicated region
    $region10: #{_lambda_.1} parent=1 // pred_check
      _
    $region11: #{_lambda_.1} parent=1 // pred_check_branch
      %40 = sbr.rel (0) target = $region13
    $region12: #{_lambda_.1} parent=1 // pred_region
      %42 = vsyncadd [#allocation6], 0
      %s43 = sshll.u32 %s2, 4
      %s44 = int_to_ptr.hbm [resolvable:$true] %s43
      %s45 = sshll.u32 [#allocation7], 4
      %s46 = int_to_ptr.vmem [resolvable:$true] %s45
      %51 = dma.hbm_to_vmem [thread:$0]  %s44, 768, %s46, [#allocation6], 64, 64, 4
    $region13: #{_lambda_.1} parent=1 // pred_fallthru
      _
    // Predicated region
    $region14: #{_lambda_.1} parent=1 // pred_check
      _
    $region15: #{_lambda_.1} parent=1 // pred_check_branch
      %53 = sbr.rel (0) target = $region17
    $region16: #{_lambda_.1} parent=1 // pred_region
      _
    $region17: #{_lambda_.1} parent=1 // pred_fallthru
      _
    // Predicated region
    $region18: #{_lambda_.1} parent=1 // pred_check
      _
    $region19: #{_lambda_.1} parent=1 // pred_check_branch
      %55 = sbr.rel (0) target = $region21
    $region20: #{_lambda_.1} parent=1 // pred_region
      _
    $region21: #{_lambda_.1} parent=1 // pred_fallthru
      _
    // Predicated region
    $region22: #{_lambda_.1} parent=1 // pred_check
      _
    $region23: #{_lambda_.1} parent=1 // pred_check_branch
      %57 = sbr.rel (0) target = $region25
    $region24: #{_lambda_.1} parent=1 // pred_region
      _
    $region25: #{_lambda_.1} parent=1 // pred_fallthru
      _
    // Predicated region
    $region26: #{_lambda_.1} parent=1 // pred_check
      _
    $region27: #{_lambda_.1} parent=1 // pred_check_branch
      %59 = sbr.rel (0) target = $region29
    $region28: #{_lambda_.1} parent=1 // pred_region
      %61 = dma.done [#allocation4], 256
    $region29: #{_lambda_.1} parent=1 // pred_fallthru
      _
    // Predicated region
    $region30: #{_lambda_.1} parent=1 // pred_check
      _
    $region31: #{_lambda_.1} parent=1 // pred_check_branch
      %63 = sbr.rel (0) target = $region33
    $region32: #{_lambda_.1} parent=1 // pred_region
      %65 = dma.done [#allocation6], 384
    $region33: #{_lambda_.1} parent=1 // pred_fallthru
      _
    // Predicated region
    $region34: #{_lambda_.1} parent=1 // pred_check
      _
    $region35: #{_lambda_.1} parent=1 // pred_check_branch
      %67 = sbr.rel (0) target = $region37
    $region36: #{_lambda_.1} parent=1 // pred_region
      %69 = dma.done [#allocation6], 768
    $region37: #{_lambda_.1} parent=1 // pred_fallthru
      _
    %p71 = scmp.eq.s32.totalorder 0, 0
    // Predicated region
    $region38: #{_lambda_.1} parent=1 // pred_check
      %p72 = pneg %p71
    $region39: #{_lambda_.1} parent=1 // pred_check_branch
      %74 = sbr.rel (%p72) target = $region41
    $region40: #{_lambda_.1} parent=1 // pred_region
      %v75 = vld [vmem:[%s5] sm:$0x3]
      %vm76 = vcmask 254976
      %77 = vst.msk [vmem:[#allocation2] sm:$0x3] %vm76, %v75
    $region41: #{_lambda_.1} parent=1 // pred_fallthru
      _
    %v78 = vld [vmem:[#allocation3] sm:$0xff]
    %v79 = vld [vmem:[#allocation3 + $0x8] sm:$0xff]
    %v80 = vpack.c.bf16 %v79, %v78
    %v81 = vld [vmem:[#allocation5] sm:$0xf]
    %v82 = vld [vmem:[#allocation5 + $0x4] sm:$0xf]
    %v85 = vunpack.c.l.b16 %v81
    %v86 = vunpack.c.l.b16 %v82
    %v87 = vpack.c.b16 %v86, %v85
    %vm89 = vcmask 130048
    %v91 = vsel %vm89, %v80, 0
    %93 = vmatpush.bf16.msra.mxu0 0
    %94 = vmatpush.bf16.msra.mxu0 0
    %95 = vmatpush.bf16.msra.mxu0 0
    %96 = vmatpush.bf16.msra.mxu0 0
    %97 = vmatpush.bf16.msra.mxu0 0
    %98 = vmatpush.bf16.msra.mxu0 0
    %99 = vmatpush.bf16.msra.mxu0 0
    %100 = vmatpush.bf16.msra.mxu0 %v87
    %101 = vmatmul.bf16.gmra.mxu0 %v91
    %v102 = vpop.f32.mrf.mxu0
    %v103 = vadd.f32 0.0, %v102
    %v104 = vpop.f32.mrf.mxu0
    %v105 = vadd.f32 0.0, %v104
    %106 = vdwg.mxu0
    %v107 = vld [vmem:[%s3] sm:$0x1]
    %v109 = vperm.slane %v107, 0
    %v111 = vadd.f32 %v103, %v109
    %v112 = vadd.f32 %v105, %v109
    %s113 = scalar_lea.vmem [#allocation5], 8
    %v114 = vld [vmem:[%s113] sm:$0xf]
    %v115 = vld [vmem:[%s113 + $0x4] sm:$0xf]
    %v118 = vunpack.c.l.b16 %v114
    %v119 = vunpack.c.l.b16 %v115
    %v120 = vpack.c.b16 %v119, %v118
    %122 = vmatpush.bf16.msra.mxu0 0
    %123 = vmatpush.bf16.msra.mxu0 0
    %124 = vmatpush.bf16.msra.mxu0 0
    %125 = vmatpush.bf16.msra.mxu0 0
    %126 = vmatpush.bf16.msra.mxu0 0
    %127 = vmatpush.bf16.msra.mxu0 0
    %128 = vmatpush.bf16.msra.mxu0 0
    %129 = vmatpush.bf16.msra.mxu0 %v120
    %130 = vmatmul.bf16.gmra.mxu0 %v91
    %v131 = vpop.f32.mrf.mxu0
    %v132 = vadd.f32 0.0, %v131
    %v133 = vpop.f32.mrf.mxu0
    %v134 = vadd.f32 0.0, %v133
    %135 = vdwg.mxu0
    %s136 = scalar_lea.vmem %s3, 1
    %v137 = vld [vmem:[%s136] sm:$0x1]
    %v139 = vperm.slane %v137, 0
    %v141 = vadd.f32 %v132, %v139
    %v142 = vadd.f32 %v134, %v139
    %s143 = scalar_lea.vmem [#allocation5], 16
    %v144 = vld [vmem:[%s143] sm:$0xf]
    %v145 = vld [vmem:[%s143 + $0x4] sm:$0xf]
    %v148 = vunpack.c.l.b16 %v144
    %v149 = vunpack.c.l.b16 %v145
    %v150 = vpack.c.b16 %v149, %v148
    %152 = vmatpush.bf16.msra.mxu0 0
    %153 = vmatpush.bf16.msra.mxu0 0
    %154 = vmatpush.bf16.msra.mxu0 0
    %155 = vmatpush.bf16.msra.mxu0 0
    %156 = vmatpush.bf16.msra.mxu0 0
    %157 = vmatpush.bf16.msra.mxu0 0
    %158 = vmatpush.bf16.msra.mxu0 0
    %159 = vmatpush.bf16.msra.mxu0 %v150
    %160 = vmatmul.bf16.gmra.mxu0 %v91
    %v161 = vpop.f32.mrf.mxu0
    %v162 = vadd.f32 0.0, %v161
    %v163 = vpop.f32.mrf.mxu0
    %v164 = vadd.f32 0.0, %v163
    %165 = vdwg.mxu0
    %s166 = scalar_lea.vmem %s3, 2
    %v167 = vld [vmem:[%s166] sm:$0x1]
    %v169 = vperm.slane %v167, 0
    %v171 = vadd.f32 %v162, %v169
    %v172 = vadd.f32 %v164, %v169
    %v173 = vld [vmem:[%s4] sm:$0x1]
    %v174 = vld [vmem:[#allocation2] sm:$0x3]
    %v175 = vpack.c.bf16 %v174, %v174
    %v176 = vld [vmem:[#allocation7] sm:$0xf]
    %v177 = vld [vmem:[#allocation7 + $0x4] sm:$0xf]
    %v178 = vld [vmem:[#allocation7 + $0x8] sm:$0xf]
    %v179 = vld [vmem:[#allocation7 + $0xc] sm:$0xf]
    %v184 = vunpack.c.l.b16 %v176
    %v185 = vunpack.c.l.b16 %v177
    %v186 = vunpack.c.l.b16 %v178
    %v187 = vunpack.c.l.b16 %v179
    %v188 = vpack.c.b16 %v185, %v184
    %v189 = vpack.c.b16 %v187, %v186
    %vm192 = vcmask 261120
    %v194 = vsel %vm192, %v175, 0
    %196 = vmatpush.bf16.msra.mxu0 0
    %197 = vmatpush.bf16.msra.mxu0 0
    %198 = vmatpush.bf16.msra.mxu0 0
    %199 = vmatpush.bf16.msra.mxu0 0
    %200 = vmatpush.bf16.msra.mxu0 0
    %201 = vmatpush.bf16.msra.mxu0 0
    %202 = vmatpush.bf16.msra.mxu0 %v189
    %203 = vmatpush.bf16.msra.mxu0 %v188
    %204 = vmatmul.bf16.gmra.mxu0 %v194
    %v205 = vpop.f32.mrf.mxu0
    %v206 = vadd.f32 0.0, %v205
    %v207 = vpop.f32.mrf.mxu0
    %208 = vdwg.mxu0
    %s209 = scalar_lea.vmem [#allocation7], 16
    %v210 = vld [vmem:[%s209] sm:$0xf]
    %v211 = vld [vmem:[%s209 + $0x4] sm:$0xf]
    %v212 = vld [vmem:[%s209 + $0x8] sm:$0xf]
    %v213 = vld [vmem:[%s209 + $0xc] sm:$0xf]
    %v218 = vunpack.c.l.b16 %v210
    %v219 = vunpack.c.l.b16 %v211
    %v220 = vunpack.c.l.b16 %v212
    %v221 = vunpack.c.l.b16 %v213
    %v222 = vpack.c.b16 %v219, %v218
    %v223 = vpack.c.b16 %v221, %v220
    %226 = vmatpush.bf16.msra.mxu0 0
    %227 = vmatpush.bf16.msra.mxu0 0
    %228 = vmatpush.bf16.msra.mxu0 0
    %229 = vmatpush.bf16.msra.mxu0 0
    %230 = vmatpush.bf16.msra.mxu0 0
    %231 = vmatpush.bf16.msra.mxu0 0
    %232 = vmatpush.bf16.msra.mxu0 %v223
    %233 = vmatpush.bf16.msra.mxu0 %v222
    %234 = vmatmul.bf16.gmra.mxu0 %v194
    %v235 = vpop.f32.mrf.mxu0
    %v236 = vadd.f32 0.0, %v235
    %v237 = vpop.f32.mrf.mxu0
    %238 = vdwg.mxu0
    %s239 = scalar_lea.vmem [#allocation7], 32
    %v240 = vld [vmem:[%s239] sm:$0xf]
    %v241 = vld [vmem:[%s239 + $0x4] sm:$0xf]
    %v242 = vld [vmem:[%s239 + $0x8] sm:$0xf]
    %v243 = vld [vmem:[%s239 + $0xc] sm:$0xf]
    %v245 = vrot.slane %v206, 1
    %v248 = vadd.f32 %v111, %v206
    %v249 = vadd.f32 %v112, %v245
    %v250 = vmul.f32 %v248, 0.5
    %v251 = vmul.f32 %v249, 0.5
    %v252 = vtanh.pop %v250
    %v253 = vtanh.pop %v251
    %v254 = vmul.f32 %v252, 0.5
    %v255 = vmul.f32 %v253, 0.5
    %v256 = vadd.f32 %v254, 0.5
    %v257 = vadd.f32 %v255, 0.5
    %v259 = vrot.slane %v236, 1
    %v262 = vadd.f32 %v141, %v236
    %v263 = vadd.f32 %v142, %v259
    %v264 = vmul.f32 %v262, 0.5
    %v265 = vmul.f32 %v263, 0.5
    %v266 = vtanh.pop %v264
    %v267 = vtanh.pop %v265
    %v268 = vmul.f32 %v266, 0.5
    %v269 = vmul.f32 %v267, 0.5
    %v270 = vadd.f32 %v268, 0.5
    %v271 = vadd.f32 %v269, 0.5
    %v273 = vperm.slane %v173, 0
    %v279 = vunpack.c.l.b16 %v240
    %v280 = vunpack.c.l.b16 %v241
    %v281 = vunpack.c.l.b16 %v242
    %v282 = vunpack.c.l.b16 %v243
    %v283 = vpack.c.b16 %v280, %v279
    %v284 = vpack.c.b16 %v282, %v281
    %287 = vmatpush.bf16.msra.mxu0 0
    %288 = vmatpush.bf16.msra.mxu0 0
    %289 = vmatpush.bf16.msra.mxu0 0
    %290 = vmatpush.bf16.msra.mxu0 0
    %291 = vmatpush.bf16.msra.mxu0 0
    %292 = vmatpush.bf16.msra.mxu0 0
    %293 = vmatpush.bf16.msra.mxu0 %v284
    %294 = vmatpush.bf16.msra.mxu0 %v283
    %295 = vmatmul.bf16.gmra.mxu0 %v194
    %v296 = vpop.f32.mrf.mxu0
    %v297 = vadd.f32 %v273, %v296
    %v298 = vpop.f32.mrf.mxu0
    %299 = vdwg.mxu0
    %v301 = vrot.slane %v297, 1
    %v304 = vmul.f32 %v256, %v297
    %v305 = vmul.f32 %v257, %v301
    %v306 = vadd.f32 %v171, %v304
    %v307 = vadd.f32 %v172, %v305
    %v308 = vtanh.pop %v306
    %v309 = vtanh.pop %v307
    %v312 = vrot.slane %v309, 7
    %vm313 = vcmask 1041409
    %v314 = vsel %vm313, %v312, %v308
    %v316 = vsub.f32 %v174, %v314
    %v318 = vrot.slane %v316, 1
    %v321 = vmul.f32 %v270, %v316
    %v322 = vmul.f32 %v271, %v318
    %v323 = vadd.f32 %v308, %v321
    %v324 = vadd.f32 %v309, %v322
    %vm325 = vcmask 253952
    %326 = vst.msk [vmem:[%s6] sm:$0x1] %vm325, %v323
    %327 = vst.msk [vmem:[%s6 + $0x8] sm:$0x1] %vm325, %v324
    %v328 = vpack.c.bf16 %v323, %v323
    %v329 = vpack.c.bf16 %v324, %v324
    %v330 = vld [vmem:[#allocation7] sm:$0xf]
    %v331 = vld [vmem:[#allocation7 + $0x4] sm:$0xf]
    %v332 = vld [vmem:[#allocation7 + $0x8] sm:$0xf]
    %v333 = vld [vmem:[#allocation7 + $0xc] sm:$0xf]
    %v336 = vunpack.c.l.b16 %v328
    %v337 = vunpack.c.l.b16 %v329
    %v338 = vrot.slane %v337, 7
    %v339 = vsel %vm313, %v338, %v336
    %v340 = vpack.c.b16 %v339, %v339
    %v345 = vunpack.c.l.b16 %v330
    %v346 = vunpack.c.l.b16 %v331
    %v347 = vunpack.c.l.b16 %v332
    %v348 = vunpack.c.l.b16 %v333
    %v349 = vpack.c.b16 %v346, %v345
    %v350 = vpack.c.b16 %v348, %v347
    %v354 = vsel %vm192, %v340, 0
    %356 = vmatpush.bf16.msra.mxu0 0
    %357 = vmatpush.bf16.msra.mxu0 0
    %358 = vmatpush.bf16.msra.mxu0 0
    %359 = vmatpush.bf16.msra.mxu0 0
    %360 = vmatpush.bf16.msra.mxu0 0
    %361 = vmatpush.bf16.msra.mxu0 0
    %362 = vmatpush.bf16.msra.mxu0 %v350
    %363 = vmatpush.bf16.msra.mxu0 %v349
    %364 = vmatmul.bf16.gmra.mxu0 %v354
    %v365 = vpop.f32.mrf.mxu0
    %v366 = vadd.f32 0.0, %v365
    %v367 = vpop.f32.mrf.mxu0
    %368 = vdwg.mxu0
    %v369 = vld [vmem:[%s209] sm:$0xf]
    %v370 = vld [vmem:[%s209 + $0x4] sm:$0xf]
    %v371 = vld [vmem:[%s209 + $0x8] sm:$0xf]
    %v372 = vld [vmem:[%s209 + $0xc] sm:$0xf]
    %v377 = vunpack.c.l.b16 %v369
    %v378 = vunpack.c.l.b16 %v370
    %v379 = vunpack.c.l.b16 %v371
    %v380 = vunpack.c.l.b16 %v372
    %v381 = vpack.c.b16 %v378, %v377
    %v382 = vpack.c.b16 %v380, %v379
    %385 = vmatpush.bf16.msra.mxu0 0
    %386 = vmatpush.bf16.msra.mxu0 0
    %387 = vmatpush.bf16.msra.mxu0 0
    %388 = vmatpush.bf16.msra.mxu0 0
    %389 = vmatpush.bf16.msra.mxu0 0
    %390 = vmatpush.bf16.msra.mxu0 0
    %391 = vmatpush.bf16.msra.mxu0 %v382
    %392 = vmatpush.bf16.msra.mxu0 %v381
    %393 = vmatmul.bf16.gmra.mxu0 %v354
    %v394 = vpop.f32.mrf.mxu0
    %v395 = vadd.f32 0.0, %v394
    %v396 = vpop.f32.mrf.mxu0
    %397 = vdwg.mxu0
    %v398 = vld [vmem:[%s239] sm:$0xf]
    %v399 = vld [vmem:[%s239 + $0x4] sm:$0xf]
    %v400 = vld [vmem:[%s239 + $0x8] sm:$0xf]
    %v401 = vld [vmem:[%s239 + $0xc] sm:$0xf]
    %v403 = vrot.slane %v366, 7
    %v406 = vadd.f32 %v111, %v403
    %v407 = vadd.f32 %v112, %v366
    %v408 = vmul.f32 %v406, 0.5
    %v409 = vmul.f32 %v407, 0.5
    %v410 = vtanh.pop %v408
    %v411 = vtanh.pop %v409
    %v412 = vmul.f32 %v410, 0.5
    %v413 = vmul.f32 %v411, 0.5
    %v414 = vadd.f32 %v412, 0.5
    %v415 = vadd.f32 %v413, 0.5
    %v417 = vrot.slane %v395, 7
    %v420 = vadd.f32 %v141, %v417
    %v421 = vadd.f32 %v142, %v395
    %v422 = vmul.f32 %v420, 0.5
    %v423 = vmul.f32 %v421, 0.5
    %v424 = vtanh.pop %v422
    %v425 = vtanh.pop %v423
    %v426 = vmul.f32 %v424, 0.5
    %v427 = vmul.f32 %v425, 0.5
    %v428 = vadd.f32 %v426, 0.5
    %v429 = vadd.f32 %v427, 0.5
    %v434 = vunpack.c.l.b16 %v398
    %v435 = vunpack.c.l.b16 %v399
    %v436 = vunpack.c.l.b16 %v400
    %v437 = vunpack.c.l.b16 %v401
    %v438 = vpack.c.b16 %v435, %v434
    %v439 = vpack.c.b16 %v437, %v436
    %442 = vmatpush.bf16.msra.mxu0 0
    %443 = vmatpush.bf16.msra.mxu0 0
    %444 = vmatpush.bf16.msra.mxu0 0
    %445 = vmatpush.bf16.msra.mxu0 0
    %446 = vmatpush.bf16.msra.mxu0 0
    %447 = vmatpush.bf16.msra.mxu0 0
    %448 = vmatpush.bf16.msra.mxu0 %v439
    %449 = vmatpush.bf16.msra.mxu0 %v438
    %450 = vmatmul.bf16.gmra.mxu0 %v354
    %v451 = vpop.f32.mrf.mxu0
    %v452 = vadd.f32 %v273, %v451
    %v453 = vpop.f32.mrf.mxu0
    %454 = vdwg.mxu0
    %v456 = vrot.slane %v452, 7
    %v459 = vmul.f32 %v414, %v456
    %v460 = vmul.f32 %v415, %v452
    %v461 = vadd.f32 %v171, %v459
    %v462 = vadd.f32 %v172, %v460
    %v463 = vtanh.pop %v461
    %v464 = vtanh.pop %v462
    %v467 = vrot.slane %v463, 1
    %v468 = vrot.slane %v464, 1
    %v471 = vsub.f32 %v323, %v467
    %v472 = vsub.f32 %v324, %v468
    %v475 = vrot.slane %v471, 7
    %v476 = vrot.slane %v472, 7
    %v479 = vmul.f32 %v428, %v475
    %v480 = vmul.f32 %v429, %v476
    %v481 = vadd.f32 %v463, %v479
    %v482 = vadd.f32 %v464, %v480
    %vm483 = vcmask 254977
    %484 = vst.msk [vmem:[%s6] sm:$0x2] %vm483, %v481
    %485 = vst.msk [vmem:[%s6 + $0x8] sm:$0x2] %vm483, %v482
    %v486 = vpack.c.bf16 %v481, %v481
    %v487 = vpack.c.bf16 %v482, %v482
    %v488 = vld [vmem:[#allocation7] sm:$0xf]
    %v489 = vld [vmem:[#allocation7 + $0x4] sm:$0xf]
    %v490 = vld [vmem:[#allocation7 + $0x8] sm:$0xf]
    %v491 = vld [vmem:[#allocation7 + $0xc] sm:$0xf]
    %v494 = vunpack.c.l.b16 %v486
    %v495 = vunpack.c.l.b16 %v487
    %v496 = vrot.slane %v494, 1
    %v497 = vsel %vm313, %v495, %v496
    %v498 = vpack.c.b16 %v497, %v497
    %v503 = vunpack.c.l.b16 %v488
    %v504 = vunpack.c.l.b16 %v489
    %v505 = vunpack.c.l.b16 %v490
    %v506 = vunpack.c.l.b16 %v491
    %v507 = vpack.c.b16 %v504, %v503
    %v508 = vpack.c.b16 %v506, %v505
    %v512 = vsel %vm192, %v498, 0
    %514 = vmatpush.bf16.msra.mxu0 0
    %515 = vmatpush.bf16.msra.mxu0 0
    %516 = vmatpush.bf16.msra.mxu0 0
    %517 = vmatpush.bf16.msra.mxu0 0
    %518 = vmatpush.bf16.msra.mxu0 0
    %519 = vmatpush.bf16.msra.mxu0 0
    %520 = vmatpush.bf16.msra.mxu0 %v508
    %521 = vmatpush.bf16.msra.mxu0 %v507
    %522 = vmatmul.bf16.gmra.mxu0 %v512
    %v523 = vpop.f32.mrf.mxu0
    %v524 = vadd.f32 0.0, %v523
    %v525 = vpop.f32.mrf.mxu0
    %526 = vdwg.mxu0
    %v527 = vld [vmem:[%s209] sm:$0xf]
    %v528 = vld [vmem:[%s209 + $0x4] sm:$0xf]
    %v529 = vld [vmem:[%s209 + $0x8] sm:$0xf]
    %v530 = vld [vmem:[%s209 + $0xc] sm:$0xf]
    %v535 = vunpack.c.l.b16 %v527
    %v536 = vunpack.c.l.b16 %v528
    %v537 = vunpack.c.l.b16 %v529
    %v538 = vunpack.c.l.b16 %v530
    %v539 = vpack.c.b16 %v536, %v535
    %v540 = vpack.c.b16 %v538, %v537
    %543 = vmatpush.bf16.msra.mxu0 0
    %544 = vmatpush.bf16.msra.mxu0 0
    %545 = vmatpush.bf16.msra.mxu0 0
    %546 = vmatpush.bf16.msra.mxu0 0
    %547 = vmatpush.bf16.msra.mxu0 0
    %548 = vmatpush.bf16.msra.mxu0 0
    %549 = vmatpush.bf16.msra.mxu0 %v540
    %550 = vmatpush.bf16.msra.mxu0 %v539
    %551 = vmatmul.bf16.gmra.mxu0 %v512
    %v552 = vpop.f32.mrf.mxu0
    %v553 = vadd.f32 0.0, %v552
    %v554 = vpop.f32.mrf.mxu0
    %555 = vdwg.mxu0
    %v556 = vld [vmem:[%s239] sm:$0xf]
    %v557 = vld [vmem:[%s239 + $0x4] sm:$0xf]
    %v558 = vld [vmem:[%s239 + $0x8] sm:$0xf]
    %v559 = vld [vmem:[%s239 + $0xc] sm:$0xf]
    %v561 = vrot.slane %v524, 6
    %v562 = vrot.slane %v524, 7
    %v565 = vadd.f32 %v111, %v561
    %v566 = vadd.f32 %v112, %v562
    %v567 = vmul.f32 %v565, 0.5
    %v568 = vmul.f32 %v566, 0.5
    %v569 = vtanh.pop %v567
    %v570 = vtanh.pop %v568
    %v571 = vmul.f32 %v569, 0.5
    %v572 = vmul.f32 %v570, 0.5
    %v573 = vadd.f32 %v571, 0.5
    %v574 = vadd.f32 %v572, 0.5
    %v576 = vrot.slane %v553, 6
    %v577 = vrot.slane %v553, 7
    %v580 = vadd.f32 %v141, %v576
    %v581 = vadd.f32 %v142, %v577
    %v582 = vmul.f32 %v580, 0.5
    %v583 = vmul.f32 %v581, 0.5
    %v584 = vtanh.pop %v582
    %v585 = vtanh.pop %v583
    %v586 = vmul.f32 %v584, 0.5
    %v587 = vmul.f32 %v585, 0.5
    %v588 = vadd.f32 %v586, 0.5
    %v589 = vadd.f32 %v587, 0.5
    %v594 = vunpack.c.l.b16 %v556
    %v595 = vunpack.c.l.b16 %v557
    %v596 = vunpack.c.l.b16 %v558
    %v597 = vunpack.c.l.b16 %v559
    %v598 = vpack.c.b16 %v595, %v594
    %v599 = vpack.c.b16 %v597, %v596
    %602 = vmatpush.bf16.msra.mxu0 0
    %603 = vmatpush.bf16.msra.mxu0 0
    %604 = vmatpush.bf16.msra.mxu0 0
    %605 = vmatpush.bf16.msra.mxu0 0
    %606 = vmatpush.bf16.msra.mxu0 0
    %607 = vmatpush.bf16.msra.mxu0 0
    %608 = vmatpush.bf16.msra.mxu0 %v599
    %609 = vmatpush.bf16.msra.mxu0 %v598
    %610 = vmatmul.bf16.gmra.mxu0 %v512
    %v611 = vpop.f32.mrf.mxu0
    %v612 = vadd.f32 %v273, %v611
    %v613 = vpop.f32.mrf.mxu0
    %614 = vdwg.mxu0
    %v616 = vrot.slane %v612, 6
    %v617 = vrot.slane %v612, 7
    %v620 = vmul.f32 %v573, %v616
    %v621 = vmul.f32 %v574, %v617
    %v622 = vadd.f32 %v171, %v620
    %v623 = vadd.f32 %v172, %v621
    %v624 = vtanh.pop %v622
    %v625 = vtanh.pop %v623
    %v628 = vrot.slane %v624, 1
    %v629 = vrot.slane %v625, 1
    %v632 = vsub.f32 %v481, %v628
    %v633 = vsub.f32 %v482, %v629
    %v636 = vrot.slane %v632, 7
    %v637 = vrot.slane %v633, 7
    %v640 = vmul.f32 %v588, %v636
    %v641 = vmul.f32 %v589, %v637
    %v642 = vadd.f32 %v624, %v640
    %v643 = vadd.f32 %v625, %v641
    %vm644 = vcmask 256002
    %645 = vst.msk [vmem:[%s6] sm:$0x4] %vm644, %v642
    %646 = vst.msk [vmem:[%s6 + $0x8] sm:$0x4] %vm644, %v643
    %v647 = vpack.c.bf16 %v642, %v642
    %v648 = vpack.c.bf16 %v643, %v643
    %v649 = vld [vmem:[#allocation7] sm:$0xf]
    %v650 = vld [vmem:[#allocation7 + $0x4] sm:$0xf]
    %v651 = vld [vmem:[#allocation7 + $0x8] sm:$0xf]
    %v652 = vld [vmem:[#allocation7 + $0xc] sm:$0xf]
    %v655 = vunpack.c.l.b16 %v647
    %v656 = vunpack.c.l.b16 %v648
    %v657 = vrot.slane %v655, 2
    %v658 = vrot.slane %v656, 1
    %v659 = vsel %vm313, %v658, %v657
    %v660 = vpack.c.b16 %v659, %v659
    %v665 = vunpack.c.l.b16 %v649
    %v666 = vunpack.c.l.b16 %v650
    %v667 = vunpack.c.l.b16 %v651
    %v668 = vunpack.c.l.b16 %v652
    %v669 = vpack.c.b16 %v666, %v665
    %v670 = vpack.c.b16 %v668, %v667
    %v674 = vsel %vm192, %v660, 0
    %676 = vmatpush.bf16.msra.mxu0 0
    %677 = vmatpush.bf16.msra.mxu0 0
    %678 = vmatpush.bf16.msra.mxu0 0
    %679 = vmatpush.bf16.msra.mxu0 0
    %680 = vmatpush.bf16.msra.mxu0 0
    %681 = vmatpush.bf16.msra.mxu0 0
    %682 = vmatpush.bf16.msra.mxu0 %v670
    %683 = vmatpush.bf16.msra.mxu0 %v669
    %684 = vmatmul.bf16.gmra.mxu0 %v674
    %v685 = vpop.f32.mrf.mxu0
    %v686 = vadd.f32 0.0, %v685
    %v687 = vpop.f32.mrf.mxu0
    %688 = vdwg.mxu0
    %v689 = vld [vmem:[%s209] sm:$0xf]
    %v690 = vld [vmem:[%s209 + $0x4] sm:$0xf]
    %v691 = vld [vmem:[%s209 + $0x8] sm:$0xf]
    %v692 = vld [vmem:[%s209 + $0xc] sm:$0xf]
    %v697 = vunpack.c.l.b16 %v689
    %v698 = vunpack.c.l.b16 %v690
    %v699 = vunpack.c.l.b16 %v691
    %v700 = vunpack.c.l.b16 %v692
    %v701 = vpack.c.b16 %v698, %v697
    %v702 = vpack.c.b16 %v700, %v699
    %705 = vmatpush.bf16.msra.mxu0 0
    %706 = vmatpush.bf16.msra.mxu0 0
    %707 = vmatpush.bf16.msra.mxu0 0
    %708 = vmatpush.bf16.msra.mxu0 0
    %709 = vmatpush.bf16.msra.mxu0 0
    %710 = vmatpush.bf16.msra.mxu0 0
    %711 = vmatpush.bf16.msra.mxu0 %v702
    %712 = vmatpush.bf16.msra.mxu0 %v701
    %713 = vmatmul.bf16.gmra.mxu0 %v674
    %v714 = vpop.f32.mrf.mxu0
    %v715 = vadd.f32 0.0, %v714
    %v716 = vpop.f32.mrf.mxu0
    %717 = vdwg.mxu0
    %v718 = vld [vmem:[%s239] sm:$0xf]
    %v719 = vld [vmem:[%s239 + $0x4] sm:$0xf]
    %v720 = vld [vmem:[%s239 + $0x8] sm:$0xf]
    %v721 = vld [vmem:[%s239 + $0xc] sm:$0xf]
    %v723 = vrot.slane %v686, 5
    %v724 = vrot.slane %v686, 6
    %v727 = vadd.f32 %v111, %v723
    %v728 = vadd.f32 %v112, %v724
    %v729 = vmul.f32 %v727, 0.5
    %v730 = vmul.f32 %v728, 0.5
    %v731 = vtanh.pop %v729
    %v732 = vtanh.pop %v730
    %v733 = vmul.f32 %v731, 0.5
    %v734 = vmul.f32 %v732, 0.5
    %v735 = vadd.f32 %v733, 0.5
    %v736 = vadd.f32 %v734, 0.5
    %v738 = vrot.slane %v715, 5
    %v739 = vrot.slane %v715, 6
    %v742 = vadd.f32 %v141, %v738
    %v743 = vadd.f32 %v142, %v739
    %v744 = vmul.f32 %v742, 0.5
    %v745 = vmul.f32 %v743, 0.5
    %v746 = vtanh.pop %v744
    %v747 = vtanh.pop %v745
    %v748 = vmul.f32 %v746, 0.5
    %v749 = vmul.f32 %v747, 0.5
    %v750 = vadd.f32 %v748, 0.5
    %v751 = vadd.f32 %v749, 0.5
    %v756 = vunpack.c.l.b16 %v718
    %v757 = vunpack.c.l.b16 %v719
    %v758 = vunpack.c.l.b16 %v720
    %v759 = vunpack.c.l.b16 %v721
    %v760 = vpack.c.b16 %v757, %v756
    %v761 = vpack.c.b16 %v759, %v758
    %764 = vmatpush.bf16.msra.mxu0 0
    %765 = vmatpush.bf16.msra.mxu0 0
    %766 = vmatpush.bf16.msra.mxu0 0
    %767 = vmatpush.bf16.msra.mxu0 0
    %768 = vmatpush.bf16.msra.mxu0 0
    %769 = vmatpush.bf16.msra.mxu0 0
    %770 = vmatpush.bf16.msra.mxu0 %v761
    %771 = vmatpush.bf16.msra.mxu0 %v760
    %772 = vmatmul.bf16.gmra.mxu0 %v674
    %v773 = vpop.f32.mrf.mxu0
    %v774 = vadd.f32 %v273, %v773
    %v775 = vpop.f32.mrf.mxu0
    %776 = vdwg.mxu0
    %v778 = vrot.slane %v774, 5
    %v779 = vrot.slane %v774, 6
    %v782 = vmul.f32 %v735, %v778
    %v783 = vmul.f32 %v736, %v779
    %v784 = vadd.f32 %v171, %v782
    %v785 = vadd.f32 %v172, %v783
    %v786 = vtanh.pop %v784
    %v787 = vtanh.pop %v785
    %v790 = vrot.slane %v786, 1
    %v791 = vrot.slane %v787, 1
    %v794 = vsub.f32 %v642, %v790
    %v795 = vsub.f32 %v643, %v791
    %v798 = vrot.slane %v794, 7
    %v799 = vrot.slane %v795, 7
    %v802 = vmul.f32 %v750, %v798
    %v803 = vmul.f32 %v751, %v799
    %v804 = vadd.f32 %v786, %v802
    %v805 = vadd.f32 %v787, %v803
    %vm806 = vcmask 257027
    %807 = vst.msk [vmem:[%s6] sm:$0x8] %vm806, %v804
    %808 = vst.msk [vmem:[%s6 + $0x8] sm:$0x8] %vm806, %v805
    %v809 = vpack.c.bf16 %v804, %v804
    %v810 = vpack.c.bf16 %v805, %v805
    %v811 = vld [vmem:[#allocation7] sm:$0xf]
    %v812 = vld [vmem:[#allocation7 + $0x4] sm:$0xf]
    %v813 = vld [vmem:[#allocation7 + $0x8] sm:$0xf]
    %v814 = vld [vmem:[#allocation7 + $0xc] sm:$0xf]
    %v817 = vunpack.c.l.b16 %v809
    %v818 = vunpack.c.l.b16 %v810
    %v819 = vrot.slane %v817, 3
    %v820 = vrot.slane %v818, 2
    %v821 = vsel %vm313, %v820, %v819
    %v822 = vpack.c.b16 %v821, %v821
    %v827 = vunpack.c.l.b16 %v811
    %v828 = vunpack.c.l.b16 %v812
    %v829 = vunpack.c.l.b16 %v813
    %v830 = vunpack.c.l.b16 %v814
    %v831 = vpack.c.b16 %v828, %v827
    %v832 = vpack.c.b16 %v830, %v829
    %v836 = vsel %vm192, %v822, 0
    %838 = vmatpush.bf16.msra.mxu0 0
    %839 = vmatpush.bf16.msra.mxu0 0
    %840 = vmatpush.bf16.msra.mxu0 0
    %841 = vmatpush.bf16.msra.mxu0 0
    %842 = vmatpush.bf16.msra.mxu0 0
    %843 = vmatpush.bf16.msra.mxu0 0
    %844 = vmatpush.bf16.msra.mxu0 %v832
    %845 = vmatpush.bf16.msra.mxu0 %v831
    %846 = vmatmul.bf16.gmra.mxu0 %v836
    %v847 = vpop.f32.mrf.mxu0
    %v848 = vadd.f32 0.0, %v847
    %v849 = vpop.f32.mrf.mxu0
    %850 = vdwg.mxu0
    %v851 = vld [vmem:[%s209] sm:$0xf]
    %v852 = vld [vmem:[%s209 + $0x4] sm:$0xf]
    %v853 = vld [vmem:[%s209 + $0x8] sm:$0xf]
    %v854 = vld [vmem:[%s209 + $0xc] sm:$0xf]
    %v859 = vunpack.c.l.b16 %v851
    %v860 = vunpack.c.l.b16 %v852
    %v861 = vunpack.c.l.b16 %v853
    %v862 = vunpack.c.l.b16 %v854
    %v863 = vpack.c.b16 %v860, %v859
    %v864 = vpack.c.b16 %v862, %v861
    %867 = vmatpush.bf16.msra.mxu0 0
    %868 = vmatpush.bf16.msra.mxu0 0
    %869 = vmatpush.bf16.msra.mxu0 0
    %870 = vmatpush.bf16.msra.mxu0 0
    %871 = vmatpush.bf16.msra.mxu0 0
    %872 = vmatpush.bf16.msra.mxu0 0
    %873 = vmatpush.bf16.msra.mxu0 %v864
    %874 = vmatpush.bf16.msra.mxu0 %v863
    %875 = vmatmul.bf16.gmra.mxu0 %v836
    %v876 = vpop.f32.mrf.mxu0
    %v877 = vadd.f32 0.0, %v876
    %v878 = vpop.f32.mrf.mxu0
    %879 = vdwg.mxu0
    %v880 = vld [vmem:[%s239] sm:$0xf]
    %v881 = vld [vmem:[%s239 + $0x4] sm:$0xf]
    %v882 = vld [vmem:[%s239 + $0x8] sm:$0xf]
    %v883 = vld [vmem:[%s239 + $0xc] sm:$0xf]
    %v885 = vrot.slane %v848, 4
    %v886 = vrot.slane %v848, 5
    %v889 = vadd.f32 %v111, %v885
    %v890 = vadd.f32 %v112, %v886
    %v891 = vmul.f32 %v889, 0.5
    %v892 = vmul.f32 %v890, 0.5
    %v893 = vtanh.pop %v891
    %v894 = vtanh.pop %v892
    %v895 = vmul.f32 %v893, 0.5
    %v896 = vmul.f32 %v894, 0.5
    %v897 = vadd.f32 %v895, 0.5
    %v898 = vadd.f32 %v896, 0.5
    %v900 = vrot.slane %v877, 4
    %v901 = vrot.slane %v877, 5
    %v904 = vadd.f32 %v141, %v900
    %v905 = vadd.f32 %v142, %v901
    %v906 = vmul.f32 %v904, 0.5
    %v907 = vmul.f32 %v905, 0.5
    %v908 = vtanh.pop %v906
    %v909 = vtanh.pop %v907
    %v910 = vmul.f32 %v908, 0.5
    %v911 = vmul.f32 %v909, 0.5
    %v912 = vadd.f32 %v910, 0.5
    %v913 = vadd.f32 %v911, 0.5
    %v918 = vunpack.c.l.b16 %v880
    %v919 = vunpack.c.l.b16 %v881
    %v920 = vunpack.c.l.b16 %v882
    %v921 = vunpack.c.l.b16 %v883
    %v922 = vpack.c.b16 %v919, %v918
    %v923 = vpack.c.b16 %v921, %v920
    %926 = vmatpush.bf16.msra.mxu0 0
    %927 = vmatpush.bf16.msra.mxu0 0
    %928 = vmatpush.bf16.msra.mxu0 0
    %929 = vmatpush.bf16.msra.mxu0 0
    %930 = vmatpush.bf16.msra.mxu0 0
    %931 = vmatpush.bf16.msra.mxu0 0
    %932 = vmatpush.bf16.msra.mxu0 %v923
    %933 = vmatpush.bf16.msra.mxu0 %v922
    %934 = vmatmul.bf16.gmra.mxu0 %v836
    %v935 = vpop.f32.mrf.mxu0
    %v936 = vadd.f32 %v273, %v935
    %v937 = vpop.f32.mrf.mxu0
    %938 = vdwg.mxu0
    %v940 = vrot.slane %v936, 4
    %v941 = vrot.slane %v936, 5
    %v944 = vmul.f32 %v897, %v940
    %v945 = vmul.f32 %v898, %v941
    %v946 = vadd.f32 %v171, %v944
    %v947 = vadd.f32 %v172, %v945
    %v948 = vtanh.pop %v946
    %v949 = vtanh.pop %v947
    %v952 = vrot.slane %v948, 1
    %v953 = vrot.slane %v949, 1
    %v956 = vsub.f32 %v804, %v952
    %v957 = vsub.f32 %v805, %v953
    %v960 = vrot.slane %v956, 7
    %v961 = vrot.slane %v957, 7
    %v964 = vmul.f32 %v912, %v960
    %v965 = vmul.f32 %v913, %v961
    %v966 = vadd.f32 %v948, %v964
    %v967 = vadd.f32 %v949, %v965
    %vm968 = vcmask 258052
    %969 = vst.msk [vmem:[%s6] sm:$0x10] %vm968, %v966
    %970 = vst.msk [vmem:[%s6 + $0x8] sm:$0x10] %vm968, %v967
    %v971 = vpack.c.bf16 %v966, %v966
    %v972 = vpack.c.bf16 %v967, %v967
    %v973 = vld [vmem:[#allocation7] sm:$0xf]
    %v974 = vld [vmem:[#allocation7 + $0x4] sm:$0xf]
    %v975 = vld [vmem:[#allocation7 + $0x8] sm:$0xf]
    %v976 = vld [vmem:[#allocation7 + $0xc] sm:$0xf]
    %v979 = vunpack.c.l.b16 %v971
    %v980 = vunpack.c.l.b16 %v972
    %v981 = vrot.slane %v979, 4
    %v982 = vrot.slane %v980, 3
    %v983 = vsel %vm313, %v982, %v981
    %v984 = vpack.c.b16 %v983, %v983
    %v989 = vunpack.c.l.b16 %v973
    %v990 = vunpack.c.l.b16 %v974
    %v991 = vunpack.c.l.b16 %v975
    %v992 = vunpack.c.l.b16 %v976
    %v993 = vpack.c.b16 %v990, %v989
    %v994 = vpack.c.b16 %v992, %v991
    %v998 = vsel %vm192, %v984, 0
    %1000 = vmatpush.bf16.msra.mxu0 0
    %1001 = vmatpush.bf16.msra.mxu0 0
    %1002 = vmatpush.bf16.msra.mxu0 0
    %1003 = vmatpush.bf16.msra.mxu0 0
    %1004 = vmatpush.bf16.msra.mxu0 0
    %1005 = vmatpush.bf16.msra.mxu0 0
    %1006 = vmatpush.bf16.msra.mxu0 %v994
    %1007 = vmatpush.bf16.msra.mxu0 %v993
    %1008 = vmatmul.bf16.gmra.mxu0 %v998
    %v1009 = vpop.f32.mrf.mxu0
    %v1010 = vadd.f32 0.0, %v1009
    %v1011 = vpop.f32.mrf.mxu0
    %1012 = vdwg.mxu0
    %v1013 = vld [vmem:[%s209] sm:$0xf]
    %v1014 = vld [vmem:[%s209 + $0x4] sm:$0xf]
    %v1015 = vld [vmem:[%s209 + $0x8] sm:$0xf]
    %v1016 = vld [vmem:[%s209 + $0xc] sm:$0xf]
    %v1021 = vunpack.c.l.b16 %v1013
    %v1022 = vunpack.c.l.b16 %v1014
    %v1023 = vunpack.c.l.b16 %v1015
    %v1024 = vunpack.c.l.b16 %v1016
    %v1025 = vpack.c.b16 %v1022, %v1021
    %v1026 = vpack.c.b16 %v1024, %v1023
    %1029 = vmatpush.bf16.msra.mxu0 0
    %1030 = vmatpush.bf16.msra.mxu0 0
    %1031 = vmatpush.bf16.msra.mxu0 0
    %1032 = vmatpush.bf16.msra.mxu0 0
    %1033 = vmatpush.bf16.msra.mxu0 0
    %1034 = vmatpush.bf16.msra.mxu0 0
    %1035 = vmatpush.bf16.msra.mxu0 %v1026
    %1036 = vmatpush.bf16.msra.mxu0 %v1025
    %1037 = vmatmul.bf16.gmra.mxu0 %v998
    %v1038 = vpop.f32.mrf.mxu0
    %v1039 = vadd.f32 0.0, %v1038
    %v1040 = vpop.f32.mrf.mxu0
    %1041 = vdwg.mxu0
    %v1042 = vld [vmem:[%s239] sm:$0xf]
    %v1043 = vld [vmem:[%s239 + $0x4] sm:$0xf]
    %v1044 = vld [vmem:[%s239 + $0x8] sm:$0xf]
    %v1045 = vld [vmem:[%s239 + $0xc] sm:$0xf]
    %v1047 = vrot.slane %v1010, 3
    %v1048 = vrot.slane %v1010, 4
    %v1051 = vadd.f32 %v111, %v1047
    %v1052 = vadd.f32 %v112, %v1048
    %v1053 = vmul.f32 %v1051, 0.5
    %v1054 = vmul.f32 %v1052, 0.5
    %v1055 = vtanh.pop %v1053
    %v1056 = vtanh.pop %v1054
    %v1057 = vmul.f32 %v1055, 0.5
    %v1058 = vmul.f32 %v1056, 0.5
    %v1059 = vadd.f32 %v1057, 0.5
    %v1060 = vadd.f32 %v1058, 0.5
    %v1062 = vrot.slane %v1039, 3
    %v1063 = vrot.slane %v1039, 4
    %v1066 = vadd.f32 %v141, %v1062
    %v1067 = vadd.f32 %v142, %v1063
    %v1068 = vmul.f32 %v1066, 0.5
    %v1069 = vmul.f32 %v1067, 0.5
    %v1070 = vtanh.pop %v1068
    %v1071 = vtanh.pop %v1069
    %v1072 = vmul.f32 %v1070, 0.5
    %v1073 = vmul.f32 %v1071, 0.5
    %v1074 = vadd.f32 %v1072, 0.5
    %v1075 = vadd.f32 %v1073, 0.5
    %v1080 = vunpack.c.l.b16 %v1042
    %v1081 = vunpack.c.l.b16 %v1043
    %v1082 = vunpack.c.l.b16 %v1044
    %v1083 = vunpack.c.l.b16 %v1045
    %v1084 = vpack.c.b16 %v1081, %v1080
    %v1085 = vpack.c.b16 %v1083, %v1082
    %1088 = vmatpush.bf16.msra.mxu0 0
    %1089 = vmatpush.bf16.msra.mxu0 0
    %1090 = vmatpush.bf16.msra.mxu0 0
    %1091 = vmatpush.bf16.msra.mxu0 0
    %1092 = vmatpush.bf16.msra.mxu0 0
    %1093 = vmatpush.bf16.msra.mxu0 0
    %1094 = vmatpush.bf16.msra.mxu0 %v1085
    %1095 = vmatpush.bf16.msra.mxu0 %v1084
    %1096 = vmatmul.bf16.gmra.mxu0 %v998
    %v1097 = vpop.f32.mrf.mxu0
    %v1098 = vadd.f32 %v273, %v1097
    %v1099 = vpop.f32.mrf.mxu0
    %1100 = vdwg.mxu0
    %v1102 = vrot.slane %v1098, 3
    %v1103 = vrot.slane %v1098, 4
    %v1106 = vmul.f32 %v1059, %v1102
    %v1107 = vmul.f32 %v1060, %v1103
    %v1108 = vadd.f32 %v171, %v1106
    %v1109 = vadd.f32 %v172, %v1107
    %v1110 = vtanh.pop %v1108
    %v1111 = vtanh.pop %v1109
    %v1114 = vrot.slane %v1110, 1
    %v1115 = vrot.slane %v1111, 1
    %v1118 = vsub.f32 %v966, %v1114
    %v1119 = vsub.f32 %v967, %v1115
    %v1122 = vrot.slane %v1118, 7
    %v1123 = vrot.slane %v1119, 7
    %v1126 = vmul.f32 %v1074, %v1122
    %v1127 = vmul.f32 %v1075, %v1123
    %v1128 = vadd.f32 %v1110, %v1126
    %v1129 = vadd.f32 %v1111, %v1127
    %vm1130 = vcmask 259077
    %1131 = vst.msk [vmem:[%s6] sm:$0x20] %vm1130, %v1128
    %1132 = vst.msk [vmem:[%s6 + $0x8] sm:$0x20] %vm1130, %v1129
    %v1133 = vpack.c.bf16 %v1128, %v1128
    %v1134 = vpack.c.bf16 %v1129, %v1129
    %v1135 = vld [vmem:[#allocation7] sm:$0xf]
    %v1136 = vld [vmem:[#allocation7 + $0x4] sm:$0xf]
    %v1137 = vld [vmem:[#allocation7 + $0x8] sm:$0xf]
    %v1138 = vld [vmem:[#allocation7 + $0xc] sm:$0xf]
    %v1141 = vunpack.c.l.b16 %v1133
    %v1142 = vunpack.c.l.b16 %v1134
    %v1143 = vrot.slane %v1141, 5
    %v1144 = vrot.slane %v1142, 4
    %v1145 = vsel %vm313, %v1144, %v1143
    %v1146 = vpack.c.b16 %v1145, %v1145
    %v1151 = vunpack.c.l.b16 %v1135
    %v1152 = vunpack.c.l.b16 %v1136
    %v1153 = vunpack.c.l.b16 %v1137
    %v1154 = vunpack.c.l.b16 %v1138
    %v1155 = vpack.c.b16 %v1152, %v1151
    %v1156 = vpack.c.b16 %v1154, %v1153
    %v1160 = vsel %vm192, %v1146, 0
    %1162 = vmatpush.bf16.msra.mxu0 0
    %1163 = vmatpush.bf16.msra.mxu0 0
    %1164 = vmatpush.bf16.msra.mxu0 0
    %1165 = vmatpush.bf16.msra.mxu0 0
    %1166 = vmatpush.bf16.msra.mxu0 0
    %1167 = vmatpush.bf16.msra.mxu0 0
    %1168 = vmatpush.bf16.msra.mxu0 %v1156
    %1169 = vmatpush.bf16.msra.mxu0 %v1155
    %1170 = vmatmul.bf16.gmra.mxu0 %v1160
    %v1171 = vpop.f32.mrf.mxu0
    %v1172 = vadd.f32 0.0, %v1171
    %v1173 = vpop.f32.mrf.mxu0
    %1174 = vdwg.mxu0
    %v1175 = vld [vmem:[%s209] sm:$0xf]
    %v1176 = vld [vmem:[%s209 + $0x4] sm:$0xf]
    %v1177 = vld [vmem:[%s209 + $0x8] sm:$0xf]
    %v1178 = vld [vmem:[%s209 + $0xc] sm:$0xf]
    %v1183 = vunpack.c.l.b16 %v1175
    %v1184 = vunpack.c.l.b16 %v1176
    %v1185 = vunpack.c.l.b16 %v1177
    %v1186 = vunpack.c.l.b16 %v1178
    %v1187 = vpack.c.b16 %v1184, %v1183
    %v1188 = vpack.c.b16 %v1186, %v1185
    %1191 = vmatpush.bf16.msra.mxu0 0
    %1192 = vmatpush.bf16.msra.mxu0 0
    %1193 = vmatpush.bf16.msra.mxu0 0
    %1194 = vmatpush.bf16.msra.mxu0 0
    %1195 = vmatpush.bf16.msra.mxu0 0
    %1196 = vmatpush.bf16.msra.mxu0 0
    %1197 = vmatpush.bf16.msra.mxu0 %v1188
    %1198 = vmatpush.bf16.msra.mxu0 %v1187
    %1199 = vmatmul.bf16.gmra.mxu0 %v1160
    %v1200 = vpop.f32.mrf.mxu0
    %v1201 = vadd.f32 0.0, %v1200
    %v1202 = vpop.f32.mrf.mxu0
    %1203 = vdwg.mxu0
    %v1204 = vld [vmem:[%s239] sm:$0xf]
    %v1205 = vld [vmem:[%s239 + $0x4] sm:$0xf]
    %v1206 = vld [vmem:[%s239 + $0x8] sm:$0xf]
    %v1207 = vld [vmem:[%s239 + $0xc] sm:$0xf]
    %v1209 = vrot.slane %v1172, 2
    %v1210 = vrot.slane %v1172, 3
    %v1213 = vadd.f32 %v111, %v1209
    %v1214 = vadd.f32 %v112, %v1210
    %v1215 = vmul.f32 %v1213, 0.5
    %v1216 = vmul.f32 %v1214, 0.5
    %v1217 = vtanh.pop %v1215
    %v1218 = vtanh.pop %v1216
    %v1219 = vmul.f32 %v1217, 0.5
    %v1220 = vmul.f32 %v1218, 0.5
    %v1221 = vadd.f32 %v1219, 0.5
    %v1222 = vadd.f32 %v1220, 0.5
    %v1224 = vrot.slane %v1201, 2
    %v1225 = vrot.slane %v1201, 3
    %v1228 = vadd.f32 %v141, %v1224
    %v1229 = vadd.f32 %v142, %v1225
    %v1230 = vmul.f32 %v1228, 0.5
    %v1231 = vmul.f32 %v1229, 0.5
    %v1232 = vtanh.pop %v1230
    %v1233 = vtanh.pop %v1231
    %v1234 = vmul.f32 %v1232, 0.5
    %v1235 = vmul.f32 %v1233, 0.5
    %v1236 = vadd.f32 %v1234, 0.5
    %v1237 = vadd.f32 %v1235, 0.5
    %v1242 = vunpack.c.l.b16 %v1204
    %v1243 = vunpack.c.l.b16 %v1205
    %v1244 = vunpack.c.l.b16 %v1206
    %v1245 = vunpack.c.l.b16 %v1207
    %v1246 = vpack.c.b16 %v1243, %v1242
    %v1247 = vpack.c.b16 %v1245, %v1244
    %1250 = vmatpush.bf16.msra.mxu0 0
    %1251 = vmatpush.bf16.msra.mxu0 0
    %1252 = vmatpush.bf16.msra.mxu0 0
    %1253 = vmatpush.bf16.msra.mxu0 0
    %1254 = vmatpush.bf16.msra.mxu0 0
    %1255 = vmatpush.bf16.msra.mxu0 0
    %1256 = vmatpush.bf16.msra.mxu0 %v1247
    %1257 = vmatpush.bf16.msra.mxu0 %v1246
    %1258 = vmatmul.bf16.gmra.mxu0 %v1160
    %v1259 = vpop.f32.mrf.mxu0
    %v1260 = vadd.f32 %v273, %v1259
    %v1261 = vpop.f32.mrf.mxu0
    %1262 = vdwg.mxu0
    %v1264 = vrot.slane %v1260, 2
    %v1265 = vrot.slane %v1260, 3
    %v1268 = vmul.f32 %v1221, %v1264
    %v1269 = vmul.f32 %v1222, %v1265
    %v1270 = vadd.f32 %v171, %v1268
    %v1271 = vadd.f32 %v172, %v1269
    %v1272 = vtanh.pop %v1270
    %v1273 = vtanh.pop %v1271
    %v1276 = vrot.slane %v1272, 1
    %v1277 = vrot.slane %v1273, 1
    %v1280 = vsub.f32 %v1128, %v1276
    %v1281 = vsub.f32 %v1129, %v1277
    %v1284 = vrot.slane %v1280, 7
    %v1285 = vrot.slane %v1281, 7
    %v1288 = vmul.f32 %v1236, %v1284
    %v1289 = vmul.f32 %v1237, %v1285
    %v1290 = vadd.f32 %v1272, %v1288
    %v1291 = vadd.f32 %v1273, %v1289
    %vm1292 = vcmask 260102
    %1293 = vst.msk [vmem:[%s6] sm:$0x40] %vm1292, %v1290
    %1294 = vst.msk [vmem:[%s6 + $0x8] sm:$0x40] %vm1292, %v1291
    %v1295 = vpack.c.bf16 %v1290, %v1290
    %v1296 = vpack.c.bf16 %v1291, %v1291
    %v1297 = vld [vmem:[#allocation7] sm:$0xf]
    %v1298 = vld [vmem:[#allocation7 + $0x4] sm:$0xf]
    %v1299 = vld [vmem:[#allocation7 + $0x8] sm:$0xf]
    %v1300 = vld [vmem:[#allocation7 + $0xc] sm:$0xf]
    %v1303 = vunpack.c.l.b16 %v1295
    %v1304 = vunpack.c.l.b16 %v1296
    %v1305 = vrot.slane %v1303, 6
    %v1306 = vrot.slane %v1304, 5
    %v1307 = vsel %vm313, %v1306, %v1305
    %v1308 = vpack.c.b16 %v1307, %v1307
    %v1313 = vunpack.c.l.b16 %v1297
    %v1314 = vunpack.c.l.b16 %v1298
    %v1315 = vunpack.c.l.b16 %v1299
    %v1316 = vunpack.c.l.b16 %v1300
    %v1317 = vpack.c.b16 %v1314, %v1313
    %v1318 = vpack.c.b16 %v1316, %v1315
    %v1322 = vsel %vm192, %v1308, 0
    %1324 = vmatpush.bf16.msra.mxu0 0
    %1325 = vmatpush.bf16.msra.mxu0 0
    %1326 = vmatpush.bf16.msra.mxu0 0
    %1327 = vmatpush.bf16.msra.mxu0 0
    %1328 = vmatpush.bf16.msra.mxu0 0
    %1329 = vmatpush.bf16.msra.mxu0 0
    %1330 = vmatpush.bf16.msra.mxu0 %v1318
    %1331 = vmatpush.bf16.msra.mxu0 %v1317
    %1332 = vmatmul.bf16.gmra.mxu0 %v1322
    %v1333 = vpop.f32.mrf.mxu0
    %v1334 = vadd.f32 0.0, %v1333
    %v1335 = vpop.f32.mrf.mxu0
    %1336 = vdwg.mxu0
    %v1337 = vld [vmem:[%s209] sm:$0xf]
    %v1338 = vld [vmem:[%s209 + $0x4] sm:$0xf]
    %v1339 = vld [vmem:[%s209 + $0x8] sm:$0xf]
    %v1340 = vld [vmem:[%s209 + $0xc] sm:$0xf]
    %v1345 = vunpack.c.l.b16 %v1337
    %v1346 = vunpack.c.l.b16 %v1338
    %v1347 = vunpack.c.l.b16 %v1339
    %v1348 = vunpack.c.l.b16 %v1340
    %v1349 = vpack.c.b16 %v1346, %v1345
    %v1350 = vpack.c.b16 %v1348, %v1347
    %1353 = vmatpush.bf16.msra.mxu0 0
    %1354 = vmatpush.bf16.msra.mxu0 0
    %1355 = vmatpush.bf16.msra.mxu0 0
    %1356 = vmatpush.bf16.msra.mxu0 0
    %1357 = vmatpush.bf16.msra.mxu0 0
    %1358 = vmatpush.bf16.msra.mxu0 0
    %1359 = vmatpush.bf16.msra.mxu0 %v1350
    %1360 = vmatpush.bf16.msra.mxu0 %v1349
    %1361 = vmatmul.bf16.gmra.mxu0 %v1322
    %v1362 = vpop.f32.mrf.mxu0
    %v1363 = vadd.f32 0.0, %v1362
    %v1364 = vpop.f32.mrf.mxu0
    %1365 = vdwg.mxu0
    %v1366 = vld [vmem:[%s239] sm:$0xf]
    %v1367 = vld [vmem:[%s239 + $0x4] sm:$0xf]
    %v1368 = vld [vmem:[%s239 + $0x8] sm:$0xf]
    %v1369 = vld [vmem:[%s239 + $0xc] sm:$0xf]
    %v1371 = vrot.slane %v1334, 1
    %v1372 = vrot.slane %v1334, 2
    %v1375 = vadd.f32 %v111, %v1371
    %v1376 = vadd.f32 %v112, %v1372
    %v1377 = vmul.f32 %v1375, 0.5
    %v1378 = vmul.f32 %v1376, 0.5
    %v1379 = vtanh.pop %v1377
    %v1380 = vtanh.pop %v1378
    %v1381 = vmul.f32 %v1379, 0.5
    %v1382 = vmul.f32 %v1380, 0.5
    %v1383 = vadd.f32 %v1381, 0.5
    %v1384 = vadd.f32 %v1382, 0.5
    %v1386 = vrot.slane %v1363, 1
    %v1387 = vrot.slane %v1363, 2
    %v1390 = vadd.f32 %v141, %v1386
    %v1391 = vadd.f32 %v142, %v1387
    %v1392 = vmul.f32 %v1390, 0.5
    %v1393 = vmul.f32 %v1391, 0.5
    %v1394 = vtanh.pop %v1392
    %v1395 = vtanh.pop %v1393
    %v1396 = vmul.f32 %v1394, 0.5
    %v1397 = vmul.f32 %v1395, 0.5
    %v1398 = vadd.f32 %v1396, 0.5
    %v1399 = vadd.f32 %v1397, 0.5
    %v1404 = vunpack.c.l.b16 %v1366
    %v1405 = vunpack.c.l.b16 %v1367
    %v1406 = vunpack.c.l.b16 %v1368
    %v1407 = vunpack.c.l.b16 %v1369
    %v1408 = vpack.c.b16 %v1405, %v1404
    %v1409 = vpack.c.b16 %v1407, %v1406
    %1412 = vmatpush.bf16.msra.mxu0 0
    %1413 = vmatpush.bf16.msra.mxu0 0
    %1414 = vmatpush.bf16.msra.mxu0 0
    %1415 = vmatpush.bf16.msra.mxu0 0
    %1416 = vmatpush.bf16.msra.mxu0 0
    %1417 = vmatpush.bf16.msra.mxu0 0
    %1418 = vmatpush.bf16.msra.mxu0 %v1409
    %1419 = vmatpush.bf16.msra.mxu0 %v1408
    %1420 = vmatmul.bf16.gmra.mxu0 %v1322
    %v1421 = vpop.f32.mrf.mxu0
    %v1422 = vadd.f32 %v273, %v1421
    %v1423 = vpop.f32.mrf.mxu0
    %1424 = vdwg.mxu0
    %v1426 = vrot.slane %v1422, 1
    %v1427 = vrot.slane %v1422, 2
    %v1430 = vmul.f32 %v1383, %v1426
    %v1431 = vmul.f32 %v1384, %v1427
    %v1432 = vadd.f32 %v171, %v1430
    %v1433 = vadd.f32 %v172, %v1431
    %v1434 = vtanh.pop %v1432
    %v1435 = vtanh.pop %v1433
    %v1438 = vrot.slane %v1434, 1
    %v1439 = vrot.slane %v1435, 1
    %v1442 = vsub.f32 %v1290, %v1438
    %v1443 = vsub.f32 %v1291, %v1439
    %v1446 = vrot.slane %v1442, 7
    %v1447 = vrot.slane %v1443, 7
    %v1450 = vmul.f32 %v1398, %v1446
    %v1451 = vmul.f32 %v1399, %v1447
    %v1452 = vadd.f32 %v1434, %v1450
    %v1453 = vadd.f32 %v1435, %v1451
    %vm1454 = vcmask 261127
    %1455 = vst.msk [vmem:[%s6] sm:$0x80] %vm1454, %v1452
    %1456 = vst.msk [vmem:[%s6 + $0x8] sm:$0x80] %vm1454, %v1453
    %v1459 = vrot.slane %v1453, 7
    %1462 = vst.msk [vmem:[#allocation2 - $0x7] sm:$0x80] %vm1454, %v1452
    %1463 = vst.msk [vmem:[#allocation2 + $0x1] sm:$0x1] %vm325, %v1459
    // Predicated region
    $region42: #{_lambda_.1} parent=1 // pred_check
      _
    $region43: #{_lambda_.1} parent=1 // pred_check_branch
      %1465 = sbr.rel (0) target = $region45
    $region44: #{_lambda_.1} parent=1 // pred_region
      _
    $region45: #{_lambda_.1} parent=1 // pred_fallthru
      _
    // Predicated region
    $region46: #{_lambda_.1} parent=1 // pred_check
      _
    $region47: #{_lambda_.1} parent=1 // pred_check_branch
      %1467 = sbr.rel (0) target = $region49
    $region48: #{_lambda_.1} parent=1 // pred_region
      _
    $region49: #{_lambda_.1} parent=1 // pred_fallthru
      _
    %1468 = vsyncpa [#allocation4], 1
    %1469 = vsyncpa [#allocation6], 1

</llo_original>
